<compile_context>
chip_gen: v5e
topology: v5e:2x2
jax: 0.10.0
libtpu: 0.0.40
codegen_flags: <defaults>
</compile_context>

<pallas_src>
import jax
import jax.numpy as jnp
from jax.experimental import pallas as pl
from jax.experimental.pallas import tpu as pltpu

# ----------------------------- model config ---------------------------------
B, S, H, I, V = 2, 8, 128, 256, 512   # batch, seq, hidden, intermediate, vocab
M, C = 2, 4                           # number of <mask> positions, num choices
BS = B * S
MC = M * C
MASK_TOKEN_ID = V - 1
NEG = -1e9


# ------------------------- shared math helpers ------------------------------
def _layernorm(x, g, b, eps=1e-5):
    mu = jnp.mean(x, axis=-1, keepdims=True)
    var = jnp.mean((x - mu) ** 2, axis=-1, keepdims=True)
    return (x - mu) * jax.lax.rsqrt(var + eps) * g + b


# ---------------- fused kernel: encoder + LM head + choice gather -----------
def mcq_kernel(midx_ref,                                   # scalar prefetch (SMEM) [M]
               x_ref, ab_ref,                              # [BS,H] f32, [BS,BS] f32
               wqkv, bqkv, wo, w1, b1, w2, wdh,            # bf16 weights / wide biases
               hv,                                         # [11,H] packed f32 vectors
               wdec_ch, bdec_ch,                           # [MC,H] bf16, [1,MC] f32
               out_ref):                                   # [M,C] f32
    f32, bf16 = jnp.float32, jnp.bfloat16
    hvv = hv[...]    # rows: 0 ln0g 1 ln0b 2 ln1g 3 ln1b 4 ln2g 5 ln2b
                     #       6 lnhg 7 lnhb 8 bo 9 b2 10 bdh

    # --- embeddings LayerNorm on the stacked [B*S, H] rows ---
    x = _layernorm(x_ref[...], hvv[0:1], hvv[1:2])
    xb = x.astype(bf16)

    # --- fused QKV: one [BS,H] @ [H,3H] MXU push ---
    qkv = jnp.dot(xb, wqkv[...], preferred_element_type=f32) + bqkv[...]
    q = qkv[:, 0:H].astype(bf16)
    k = qkv[:, H:2 * H].astype(bf16)
    v = qkv[:, 2 * H:3 * H].astype(bf16)

    # --- fused both-batch self-attention (single head) ---
    # q@k^T contracting hidden dims (no k.T); block-diag + key-padding bias
    # (ab_ref) keeps cross-batch attention at -1e9 -> exp underflows to 0.
    scores = jax.lax.dot_general(
        q, k, dimension_numbers=(((1,), (1,)), ((), ())),
        preferred_element_type=f32) * (1.0 / float(H) ** 0.5)          # [BS,BS]
    scores = scores + ab_ref[...]
    scores = scores - jnp.max(scores, axis=-1, keepdims=True)
    p = jnp.exp(scores)
    p = p * pl.reciprocal(jnp.sum(p, axis=-1, keepdims=True), approx=True)
    ctx = jnp.dot(p.astype(bf16), v, preferred_element_type=f32)       # [BS,H]

    attn = jnp.dot(ctx.astype(bf16), wo[...],
                   preferred_element_type=f32) + hvv[8:9]
    h1 = _layernorm(x + attn, hvv[2:3], hvv[3:4])

    # --- feed-forward ---
    ff = jax.nn.gelu(jnp.dot(h1.astype(bf16), w1[...],
                             preferred_element_type=f32) + b1[...])
    ff = jnp.dot(ff.astype(bf16), w2[...],
                 preferred_element_type=f32) + hvv[9:10]
    h2 = _layernorm(h1 + ff, hvv[4:5], hvv[5:6])                       # [BS,H]

    # --- mask-row selection as a one-hot [M,BS] matmul (mask rows are in
    #     batch 0, i.e. global rows 0..S-1 of the stacking, as in the spec's
    #     token_logits[0, mask_token_index]) ---
    rowi = jax.lax.broadcasted_iota(jnp.int32, (M, BS), 0)
    coli = jax.lax.broadcasted_iota(jnp.int32, (M, BS), 1)
    tgt = jnp.zeros((M, BS), jnp.int32)
    for mm in range(M):                       # M=2, unrolled SMEM scalar reads
        tgt = jnp.where(rowi == mm, midx_ref[mm], tgt)
    onehot = jnp.where(coli == tgt, 1.0, 0.0).astype(bf16)             # [M,BS]
    h_mask = jnp.dot(onehot, h2.astype(bf16),
                     preferred_element_type=f32)                       # [M,H]

    # --- RoBERTa LM head on the M mask rows only ---
    lm = jax.nn.gelu(jnp.dot(h_mask.astype(bf16), wdh[...],
                             preferred_element_type=f32) + hvv[10:11])
    lm = _layernorm(lm, hvv[6:7], hvv[7:8])                            # [M,H]

    # --- tied decoder restricted to the M*C gathered choice columns ---
    ch_logits = jax.lax.dot_general(
        lm.astype(bf16), wdec_ch[...],
        dimension_numbers=(((1,), (1,)), ((), ())),
        preferred_element_type=f32) + bdec_ch[...]                     # [M,MC]

    # static block-diagonal pick: out[m, c] = ch_logits[m, m*C + c]
    out_ref[...] = jnp.concatenate(
        [ch_logits[mm:mm + 1, mm * C:(mm + 1) * C] for mm in range(M)], axis=0)


def mcq_choice_logits(mask_token_index, arrays):
    def full_spec(a):
        return pl.BlockSpec(a.shape, lambda i, midx: (0, 0))   # all inputs 2-D

    # NOTE: grid=(1,) -> default double-buffering of these small weights is
    # harmless at toy size; at real XLM-R size add a layer grid axis so weight
    # DMA overlaps the MXU and size tiles for v7x's 64 MiB VMEM.
    return pl.pallas_call(
        mcq_kernel,
        out_shape=jax.ShapeDtypeStruct((M, C), jnp.float32),
        grid_spec=pltpu.PrefetchScalarGridSpec(
            num_scalar_prefetch=1,
            grid=(1,),
            in_specs=[full_spec(a) for a in arrays],
            out_specs=pl.BlockSpec((M, C), lambda i, midx: (0, 0)),
        ),
        compiler_params=pltpu.CompilerParams(
            dimension_semantics=("arbitrary",)),
    )(mask_token_index, *arrays)


# ---------------------------- parameter init --------------------------------
def init_params(key):
    ks = jax.random.split(key, 9)
    n = lambda k, shape: (0.02 * jax.random.normal(k, shape)).astype(jnp.float32)
    bf = lambda a: a.astype(jnp.bfloat16)
    ones_h = jnp.ones((1, H), jnp.float32)
    zeros_h = jnp.zeros((1, H), jnp.float32)

    word_emb = n(ks[0], (V, H))
    pos_emb = n(ks[1], (S, H))

    wqkv = bf(jnp.concatenate([n(ks[2], (H, H)), n(ks[3], (H, H)),
                               n(ks[4], (H, H))], axis=1))          # [H,3H]
    bqkv = jnp.zeros((1, 3 * H), jnp.float32)
    wo = bf(n(ks[5], (H, H)))
    w1 = bf(n(ks[6], (H, I)))
    b1 = jnp.zeros((1, I), jnp.float32)
    w2 = bf(n(ks[7], (I, H)))
    wdh = bf(n(ks[8], (H, H)))                                      # LM-head dense

    # packed per-row [1,H] vectors:
    # 0 ln0g 1 ln0b 2 ln1g 3 ln1b 4 ln2g 5 ln2b 6 lnhg 7 lnhb 8 bo 9 b2 10 bdh
    hv = jnp.concatenate([ones_h, zeros_h, ones_h, zeros_h, ones_h, zeros_h,
                          ones_h, zeros_h, zeros_h, zeros_h, zeros_h], axis=0)
    dec_bias = jnp.zeros((V,), jnp.float32)      # tied-decoder bias (gathered)
    return (word_emb, pos_emb, wqkv, bqkv, wo, w1, b1, w2, wdh, hv, dec_bias)


# ------------------------------- forward ------------------------------------
def _glue_inputs(params, input_ids, attention_masks, tokenized_choices):
    """XLA glue: embedding lookup, additive attention bias, choice-column gather."""
    (word_emb, pos_emb, wqkv, bqkv, wo, w1, b1, w2, wdh, hv, dec_bias) = params
    x2d = (jnp.take(word_emb, input_ids, axis=0) + pos_emb[None, :, :]
           ).reshape(BS, H)
    key_bias = ((1.0 - attention_masks.astype(jnp.float32)) * NEG).reshape(1, BS)
    blk = jnp.where(jnp.arange(BS)[:, None] // S == jnp.arange(BS)[None, :] // S,
                    0.0, NEG)
    attn_bias = blk + key_bias                                        # [BS,BS]
    ch_flat = tokenized_choices.reshape(-1)
    wdec_ch = jnp.take(word_emb, ch_flat, axis=0).astype(jnp.bfloat16)  # [MC,H]
    bdec_ch = jnp.take(dec_bias, ch_flat).reshape(1, MC)
    return [x2d, attn_bias, wqkv, bqkv, wo, w1, b1, w2, wdh, hv,
            wdec_ch, bdec_ch]


@jax.jit
def mcq_filler_forward(params, input_ids, attention_masks, tokenized_choices,
                       mask_token_index):
    arrays = _glue_inputs(params, input_ids, attention_masks, tokenized_choices)
    return mcq_choice_logits(mask_token_index, arrays)               # [M,C]


# --------------------------- pure-JAX reference -----------------------------
@jax.jit
def mcq_filler_ref(params, input_ids, attention_masks, tokenized_choices,
                   mask_token_index):
    f32, bf16 = jnp.float32, jnp.bfloat16
    (word_emb, pos_emb, wqkv, bqkv, wo, w1, b1, w2, wdh, hv, dec_bias) = params
    (x2d, attn_bias, wqkv, bqkv, wo, w1, b1, w2, wdh, hv,
     wdec_ch, bdec_ch) = _glue_inputs(params, input_ids, attention_masks,
                                      tokenized_choices)
    x = _layernorm(x2d, hv[0:1], hv[1:2])
    xb = x.astype(bf16)
    qkv = jnp.dot(xb, wqkv, preferred_element_type=f32) + bqkv
    q, k, v = (qkv[:, :H].astype(bf16), qkv[:, H:2 * H].astype(bf16),
               qkv[:, 2 * H:].astype(bf16))
    scores = jax.lax.dot_general(q, k, (((1,), (1,)), ((), ())),
                                 preferred_element_type=f32) * (1.0 / float(H) ** 0.5)
    p = jax.nn.softmax(scores + attn_bias, axis=-1)
    ctx = jnp.dot(p.astype(bf16), v, preferred_element_type=f32)
    attn = jnp.dot(ctx.astype(bf16), wo, preferred_element_type=f32) + hv[8:9]
    h1 = _layernorm(x + attn, hv[2:3], hv[3:4])
    ff = jax.nn.gelu(jnp.dot(h1.astype(bf16), w1, preferred_element_type=f32) + b1)
    ff = jnp.dot(ff.astype(bf16), w2, preferred_element_type=f32) + hv[9:10]
    h2 = _layernorm(h1 + ff, hv[4:5], hv[5:6])
    h_mask = h2[mask_token_index, :].astype(bf16)                     # batch-0 rows
    lm = jax.nn.gelu(jnp.dot(h_mask, wdh, preferred_element_type=f32) + hv[10:11])
    lm = _layernorm(lm, hv[6:7], hv[7:8])
    ch_logits = jax.lax.dot_general(lm.astype(bf16), wdec_ch,
                                    (((1,), (1,)), ((), ())),
                                    preferred_element_type=f32) + bdec_ch
    return jnp.stack([ch_logits[mm, mm * C:(mm + 1) * C] for mm in range(M)],
                     axis=0)


if __name__ == "__main__":
    key = jax.random.PRNGKey(0)
    k_param, k_ids, k_choice = jax.random.split(key, 3)

    params = init_params(k_param)

    input_ids = jax.random.randint(k_ids, (B, S), 0, V, dtype=jnp.int32)
    mask_token_index = jnp.array([2, 5], dtype=jnp.int32)             # [M]
    input_ids = input_ids.at[0, mask_token_index].set(MASK_TOKEN_ID)
    attention_masks = jnp.ones((B, S), dtype=jnp.int32).at[1, S - 1].set(0)
    tokenized_choices = jax.random.randint(k_choice, (M, C), 0, V, dtype=jnp.int32)

    out = mcq_filler_forward(params, input_ids, attention_masks,
                             tokenized_choices, mask_token_index)
    out = jax.block_until_ready(out)
    ref = mcq_filler_ref(params, input_ids, attention_masks,
                         tokenized_choices, mask_token_index)

    assert out.shape == (M, C) and out.dtype == jnp.float32
    assert bool(jnp.all(jnp.isfinite(out)))
    assert bool(jnp.allclose(out, ref, rtol=3e-2, atol=3e-3)), (out, ref)
    print("KERNEL_OK")
</pallas_src>

<mosaic_0001>
module attributes {stable_mosaic.version = 11 : i64} {
  func.func @mcq_kernel(%arg0: i32, %arg1: memref<2xi32, #tpu.memory_space<smem>>, %arg2: memref<16x128xf32, #tpu.memory_space<vmem>>, %arg3: memref<16x16xf32, #tpu.memory_space<vmem>>, %arg4: memref<128x384xbf16, #tpu.memory_space<vmem>>, %arg5: memref<1x384xf32, #tpu.memory_space<vmem>>, %arg6: memref<128x128xbf16, #tpu.memory_space<vmem>>, %arg7: memref<128x256xbf16, #tpu.memory_space<vmem>>, %arg8: memref<1x256xf32, #tpu.memory_space<vmem>>, %arg9: memref<256x128xbf16, #tpu.memory_space<vmem>>, %arg10: memref<128x128xbf16, #tpu.memory_space<vmem>>, %arg11: memref<11x128xf32, #tpu.memory_space<vmem>>, %arg12: memref<8x128xbf16, #tpu.memory_space<vmem>>, %arg13: memref<1x8xf32, #tpu.memory_space<vmem>>, %arg14: memref<2x4xf32, #tpu.memory_space<vmem>>) attributes {dimension_semantics = [#tpu.dimension_semantics<arbitrary>], iteration_bounds = array<i64: 1>, scalar_prefetch = 1 : i64, scratch_operands = 0 : i64, tpu.core_type = #tpu.core_type<tc>, window_params = [{pipeline_mode = #tpu.pipeline_mode<synchronous>, transform_indices = @transform_0, window_bounds = array<i64: 16, 128>}, {pipeline_mode = #tpu.pipeline_mode<synchronous>, transform_indices = @transform_1, window_bounds = array<i64: 16, 16>}, {pipeline_mode = #tpu.pipeline_mode<synchronous>, transform_indices = @transform_2, window_bounds = array<i64: 128, 384>}, {pipeline_mode = #tpu.pipeline_mode<synchronous>, transform_indices = @transform_3, window_bounds = array<i64: 1, 384>}, {pipeline_mode = #tpu.pipeline_mode<synchronous>, transform_indices = @transform_4, window_bounds = array<i64: 128, 128>}, {pipeline_mode = #tpu.pipeline_mode<synchronous>, transform_indices = @transform_5, window_bounds = array<i64: 128, 256>}, {pipeline_mode = #tpu.pipeline_mode<synchronous>, transform_indices = @transform_6, window_bounds = array<i64: 1, 256>}, {pipeline_mode = #tpu.pipeline_mode<synchronous>, transform_indices = @transform_7, window_bounds = array<i64: 256, 128>}, {pipeline_mode = #tpu.pipeline_mode<synchronous>, transform_indices = @transform_8, window_bounds = array<i64: 128, 128>}, {pipeline_mode = #tpu.pipeline_mode<synchronous>, transform_indices = @transform_9, window_bounds = array<i64: 11, 128>}, {pipeline_mode = #tpu.pipeline_mode<synchronous>, transform_indices = @transform_10, window_bounds = array<i64: 8, 128>}, {pipeline_mode = #tpu.pipeline_mode<synchronous>, transform_indices = @transform_11, window_bounds = array<i64: 1, 8>}, {pipeline_mode = #tpu.pipeline_mode<synchronous>, transform_indices = @transform_12, window_bounds = array<i64: 2, 4>}]} {
    %c0 = arith.constant 0 : index
    %c0_0 = arith.constant 0 : index
    %0 = vector.load %arg11[%c0, %c0_0] : memref<11x128xf32, #tpu.memory_space<vmem>>, vector<11x128xf32>
    %c0_1 = arith.constant 0 : index
    %c0_2 = arith.constant 0 : index
    %1 = vector.load %arg2[%c0_1, %c0_2] : memref<16x128xf32, #tpu.memory_space<vmem>>, vector<16x128xf32>
    %2 = vector.extract_strided_slice %0 {offsets = [0, 0], sizes = [1, 128], strides = [1, 1]} : vector<11x128xf32> to vector<1x128xf32>
    %3 = vector.extract_strided_slice %0 {offsets = [1, 0], sizes = [1, 128], strides = [1, 1]} : vector<11x128xf32> to vector<1x128xf32>
    %cst = arith.constant dense<0.000000e+00> : vector<16xf32>
    %4 = vector.multi_reduction <add>, %1, %cst [1] : vector<16x128xf32> to vector<16xf32>
    %5 = vector.shape_cast %4 : vector<16xf32> to vector<16x1xf32>
    %cst_3 = arith.constant 1.280000e+02 : f32
    %6 = vector.broadcast %cst_3 : f32 to vector<16x1xf32>
    %7 = arith.divf %5, %6 : vector<16x1xf32>
    %8 = vector.broadcast %7 : vector<16x1xf32> to vector<16x128xf32>
    %9 = arith.subf %1, %8 : vector<16x128xf32>
    %10 = arith.mulf %9, %9 : vector<16x128xf32>
    %cst_4 = arith.constant dense<0.000000e+00> : vector<16xf32>
    %11 = vector.multi_reduction <add>, %10, %cst_4 [1] : vector<16x128xf32> to vector<16xf32>
    %12 = vector.shape_cast %11 : vector<16xf32> to vector<16x1xf32>
    %cst_5 = arith.constant 1.280000e+02 : f32
    %13 = vector.broadcast %cst_5 : f32 to vector<16x1xf32>
    %14 = arith.divf %12, %13 : vector<16x1xf32>
    %15 = vector.broadcast %7 : vector<16x1xf32> to vector<16x128xf32>
    %16 = arith.subf %1, %15 : vector<16x128xf32>
    %cst_6 = arith.constant 9.99999974E-6 : f32
    %17 = vector.broadcast %cst_6 : f32 to vector<16x1xf32>
    %18 = arith.addf %14, %17 : vector<16x1xf32>
    %19 = math.rsqrt %18 : vector<16x1xf32>
    %20 = vector.broadcast %19 : vector<16x1xf32> to vector<16x128xf32>
    %21 = arith.mulf %16, %20 : vector<16x128xf32>
    %22 = vector.broadcast %2 : vector<1x128xf32> to vector<16x128xf32>
    %23 = arith.mulf %21, %22 : vector<16x128xf32>
    %24 = vector.broadcast %3 : vector<1x128xf32> to vector<16x128xf32>
    %25 = arith.addf %23, %24 : vector<16x128xf32>
    %26 = arith.truncf %25 : vector<16x128xf32> to vector<16x128xbf16>
    %c0_7 = arith.constant 0 : index
    %c0_8 = arith.constant 0 : index
    %27 = vector.load %arg4[%c0_7, %c0_8] : memref<128x384xbf16, #tpu.memory_space<vmem>>, vector<128x384xbf16>
    %cst_9 = arith.constant dense<0.000000e+00> : vector<16x384xf32>
    %28 = tpu.matmul %26, %27, %cst_9 {dimension_numbers = #tpu.dot_dimension_numbers<[1], [0], [0], [1], [0, 0, 1, 1], [], []>} : vector<16x128xbf16>, vector<128x384xbf16>, vector<16x384xf32> -> vector<16x384xf32>
    %c0_10 = arith.constant 0 : index
    %c0_11 = arith.constant 0 : index
    %29 = vector.load %arg5[%c0_10, %c0_11] : memref<1x384xf32, #tpu.memory_space<vmem>>, vector<1x384xf32>
    %30 = vector.broadcast %29 : vector<1x384xf32> to vector<16x384xf32>
    %31 = arith.addf %28, %30 : vector<16x384xf32>
    %32 = vector.extract_strided_slice %31 {offsets = [0, 0], sizes = [16, 128], strides = [1, 1]} : vector<16x384xf32> to vector<16x128xf32>
    %33 = arith.truncf %32 : vector<16x128xf32> to vector<16x128xbf16>
    %34 = vector.extract_strided_slice %31 {offsets = [0, 128], sizes = [16, 128], strides = [1, 1]} : vector<16x384xf32> to vector<16x128xf32>
    %35 = arith.truncf %34 : vector<16x128xf32> to vector<16x128xbf16>
    %36 = vector.extract_strided_slice %31 {offsets = [0, 256], sizes = [16, 128], strides = [1, 1]} : vector<16x384xf32> to vector<16x128xf32>
    %37 = arith.truncf %36 : vector<16x128xf32> to vector<16x128xbf16>
    %cst_12 = arith.constant dense<0.000000e+00> : vector<16x16xf32>
    %38 = tpu.matmul %33, %35, %cst_12 {dimension_numbers = #tpu.dot_dimension_numbers<[1], [1], [0], [0], [0, 0, 1, 0], [], []>} : vector<16x128xbf16>, vector<16x128xbf16>, vector<16x16xf32> -> vector<16x16xf32>
    %cst_13 = arith.constant 0.0883883461 : f32
    %39 = vector.broadcast %cst_13 : f32 to vector<16x16xf32>
    %40 = arith.mulf %38, %39 : vector<16x16xf32>
    %c0_14 = arith.constant 0 : index
    %c0_15 = arith.constant 0 : index
    %41 = vector.load %arg3[%c0_14, %c0_15] : memref<16x16xf32, #tpu.memory_space<vmem>>, vector<16x16xf32>
    %42 = arith.addf %40, %41 : vector<16x16xf32>
    %cst_16 = arith.constant dense<0xFF800000> : vector<16xf32>
    %43 = vector.multi_reduction <maximumf>, %42, %cst_16 [1] : vector<16x16xf32> to vector<16xf32>
    %44 = vector.shape_cast %43 : vector<16xf32> to vector<16x1xf32>
    %45 = vector.broadcast %44 : vector<16x1xf32> to vector<16x16xf32>
    %46 = arith.subf %42, %45 : vector<16x16xf32>
    %47 = math.exp %46 : vector<16x16xf32>
    %cst_17 = arith.constant dense<0.000000e+00> : vector<16xf32>
    %48 = vector.multi_reduction <add>, %47, %cst_17 [1] : vector<16x16xf32> to vector<16xf32>
    %49 = vector.shape_cast %48 : vector<16xf32> to vector<16x1xf32>
    %50 = tpu.reciprocal %49 {approx = true} : vector<16x1xf32> -> vector<16x1xf32>
    %51 = vector.broadcast %50 : vector<16x1xf32> to vector<16x16xf32>
    %52 = arith.mulf %47, %51 : vector<16x16xf32>
    %53 = arith.truncf %52 : vector<16x16xf32> to vector<16x16xbf16>
    %cst_18 = arith.constant dense<0.000000e+00> : vector<16x128xf32>
    %54 = tpu.matmul %53, %37, %cst_18 {dimension_numbers = #tpu.dot_dimension_numbers<[1], [0], [0], [1], [0, 0, 1, 1], [], []>} : vector<16x16xbf16>, vector<16x128xbf16>, vector<16x128xf32> -> vector<16x128xf32>
    %55 = arith.truncf %54 : vector<16x128xf32> to vector<16x128xbf16>
    %c0_19 = arith.constant 0 : index
    %c0_20 = arith.constant 0 : index
    %56 = vector.load %arg6[%c0_19, %c0_20] : memref<128x128xbf16, #tpu.memory_space<vmem>>, vector<128x128xbf16>
    %cst_21 = arith.constant dense<0.000000e+00> : vector<16x128xf32>
    %57 = tpu.matmul %55, %56, %cst_21 {dimension_numbers = #tpu.dot_dimension_numbers<[1], [0], [0], [1], [0, 0, 1, 1], [], []>} : vector<16x128xbf16>, vector<128x128xbf16>, vector<16x128xf32> -> vector<16x128xf32>
    %58 = vector.extract_strided_slice %0 {offsets = [8, 0], sizes = [1, 128], strides = [1, 1]} : vector<11x128xf32> to vector<1x128xf32>
    %59 = vector.broadcast %58 : vector<1x128xf32> to vector<16x128xf32>
    %60 = arith.addf %57, %59 : vector<16x128xf32>
    %61 = arith.addf %25, %60 : vector<16x128xf32>
    %62 = vector.extract_strided_slice %0 {offsets = [2, 0], sizes = [1, 128], strides = [1, 1]} : vector<11x128xf32> to vector<1x128xf32>
    %63 = vector.extract_strided_slice %0 {offsets = [3, 0], sizes = [1, 128], strides = [1, 1]} : vector<11x128xf32> to vector<1x128xf32>
    %cst_22 = arith.constant dense<0.000000e+00> : vector<16xf32>
    %64 = vector.multi_reduction <add>, %61, %cst_22 [1] : vector<16x128xf32> to vector<16xf32>
    %65 = vector.shape_cast %64 : vector<16xf32> to vector<16x1xf32>
    %cst_23 = arith.constant 1.280000e+02 : f32
    %66 = vector.broadcast %cst_23 : f32 to vector<16x1xf32>
    %67 = arith.divf %65, %66 : vector<16x1xf32>
    %68 = vector.broadcast %67 : vector<16x1xf32> to vector<16x128xf32>
    %69 = arith.subf %61, %68 : vector<16x128xf32>
    %70 = arith.mulf %69, %69 : vector<16x128xf32>
    %cst_24 = arith.constant dense<0.000000e+00> : vector<16xf32>
    %71 = vector.multi_reduction <add>, %70, %cst_24 [1] : vector<16x128xf32> to vector<16xf32>
    %72 = vector.shape_cast %71 : vector<16xf32> to vector<16x1xf32>
    %cst_25 = arith.constant 1.280000e+02 : f32
    %73 = vector.broadcast %cst_25 : f32 to vector<16x1xf32>
    %74 = arith.divf %72, %73 : vector<16x1xf32>
    %75 = vector.broadcast %67 : vector<16x1xf32> to vector<16x128xf32>
    %76 = arith.subf %61, %75 : vector<16x128xf32>
    %cst_26 = arith.constant 9.99999974E-6 : f32
    %77 = vector.broadcast %cst_26 : f32 to vector<16x1xf32>
    %78 = arith.addf %74, %77 : vector<16x1xf32>
    %79 = math.rsqrt %78 : vector<16x1xf32>
    %80 = vector.broadcast %79 : vector<16x1xf32> to vector<16x128xf32>
    %81 = arith.mulf %76, %80 : vector<16x128xf32>
    %82 = vector.broadcast %62 : vector<1x128xf32> to vector<16x128xf32>
    %83 = arith.mulf %81, %82 : vector<16x128xf32>
    %84 = vector.broadcast %63 : vector<1x128xf32> to vector<16x128xf32>
    %85 = arith.addf %83, %84 : vector<16x128xf32>
    %86 = arith.truncf %85 : vector<16x128xf32> to vector<16x128xbf16>
    %c0_27 = arith.constant 0 : index
    %c0_28 = arith.constant 0 : index
    %87 = vector.load %arg7[%c0_27, %c0_28] : memref<128x256xbf16, #tpu.memory_space<vmem>>, vector<128x256xbf16>
    %cst_29 = arith.constant dense<0.000000e+00> : vector<16x256xf32>
    %88 = tpu.matmul %86, %87, %cst_29 {dimension_numbers = #tpu.dot_dimension_numbers<[1], [0], [0], [1], [0, 0, 1, 1], [], []>} : vector<16x128xbf16>, vector<128x256xbf16>, vector<16x256xf32> -> vector<16x256xf32>
    %c0_30 = arith.constant 0 : index
    %c0_31 = arith.constant 0 : index
    %89 = vector.load %arg8[%c0_30, %c0_31] : memref<1x256xf32, #tpu.memory_space<vmem>>, vector<1x256xf32>
    %90 = vector.broadcast %89 : vector<1x256xf32> to vector<16x256xf32>
    %91 = arith.addf %88, %90 : vector<16x256xf32>
    %92 = arith.mulf %91, %91 : vector<16x256xf32>
    %93 = arith.mulf %91, %92 : vector<16x256xf32>
    %cst_32 = arith.constant 4.471500e-02 : f32
    %94 = vector.broadcast %cst_32 : f32 to vector<16x256xf32>
    %95 = arith.mulf %94, %93 : vector<16x256xf32>
    %96 = arith.addf %91, %95 : vector<16x256xf32>
    %cst_33 = arith.constant 0.797884583 : f32
    %97 = vector.broadcast %cst_33 : f32 to vector<16x256xf32>
    %98 = arith.mulf %97, %96 : vector<16x256xf32>
    %99 = math.tanh %98 : vector<16x256xf32>
    %cst_34 = arith.constant 1.000000e+00 : f32
    %100 = vector.broadcast %cst_34 : f32 to vector<16x256xf32>
    %101 = arith.addf %100, %99 : vector<16x256xf32>
    %cst_35 = arith.constant 5.000000e-01 : f32
    %102 = vector.broadcast %cst_35 : f32 to vector<16x256xf32>
    %103 = arith.mulf %102, %101 : vector<16x256xf32>
    %104 = arith.mulf %91, %103 : vector<16x256xf32>
    %105 = arith.truncf %104 : vector<16x256xf32> to vector<16x256xbf16>
    %c0_36 = arith.constant 0 : index
    %c0_37 = arith.constant 0 : index
    %106 = vector.load %arg9[%c0_36, %c0_37] : memref<256x128xbf16, #tpu.memory_space<vmem>>, vector<256x128xbf16>
    %cst_38 = arith.constant dense<0.000000e+00> : vector<16x128xf32>
    %107 = tpu.matmul %105, %106, %cst_38 {dimension_numbers = #tpu.dot_dimension_numbers<[1], [0], [0], [1], [0, 0, 1, 1], [], []>} : vector<16x256xbf16>, vector<256x128xbf16>, vector<16x128xf32> -> vector<16x128xf32>
    %108 = vector.extract_strided_slice %0 {offsets = [9, 0], sizes = [1, 128], strides = [1, 1]} : vector<11x128xf32> to vector<1x128xf32>
    %109 = vector.broadcast %108 : vector<1x128xf32> to vector<16x128xf32>
    %110 = arith.addf %107, %109 : vector<16x128xf32>
    %111 = arith.addf %85, %110 : vector<16x128xf32>
    %112 = vector.extract_strided_slice %0 {offsets = [4, 0], sizes = [1, 128], strides = [1, 1]} : vector<11x128xf32> to vector<1x128xf32>
    %113 = vector.extract_strided_slice %0 {offsets = [5, 0], sizes = [1, 128], strides = [1, 1]} : vector<11x128xf32> to vector<1x128xf32>
    %cst_39 = arith.constant dense<0.000000e+00> : vector<16xf32>
    %114 = vector.multi_reduction <add>, %111, %cst_39 [1] : vector<16x128xf32> to vector<16xf32>
    %115 = vector.shape_cast %114 : vector<16xf32> to vector<16x1xf32>
    %cst_40 = arith.constant 1.280000e+02 : f32
    %116 = vector.broadcast %cst_40 : f32 to vector<16x1xf32>
    %117 = arith.divf %115, %116 : vector<16x1xf32>
    %118 = vector.broadcast %117 : vector<16x1xf32> to vector<16x128xf32>
    %119 = arith.subf %111, %118 : vector<16x128xf32>
    %120 = arith.mulf %119, %119 : vector<16x128xf32>
    %cst_41 = arith.constant dense<0.000000e+00> : vector<16xf32>
    %121 = vector.multi_reduction <add>, %120, %cst_41 [1] : vector<16x128xf32> to vector<16xf32>
    %122 = vector.shape_cast %121 : vector<16xf32> to vector<16x1xf32>
    %cst_42 = arith.constant 1.280000e+02 : f32
    %123 = vector.broadcast %cst_42 : f32 to vector<16x1xf32>
    %124 = arith.divf %122, %123 : vector<16x1xf32>
    %125 = vector.broadcast %117 : vector<16x1xf32> to vector<16x128xf32>
    %126 = arith.subf %111, %125 : vector<16x128xf32>
    %cst_43 = arith.constant 9.99999974E-6 : f32
    %127 = vector.broadcast %cst_43 : f32 to vector<16x1xf32>
    %128 = arith.addf %124, %127 : vector<16x1xf32>
    %129 = math.rsqrt %128 : vector<16x1xf32>
    %130 = vector.broadcast %129 : vector<16x1xf32> to vector<16x128xf32>
    %131 = arith.mulf %126, %130 : vector<16x128xf32>
    %132 = vector.broadcast %112 : vector<1x128xf32> to vector<16x128xf32>
    %133 = arith.mulf %131, %132 : vector<16x128xf32>
    %134 = vector.broadcast %113 : vector<1x128xf32> to vector<16x128xf32>
    %135 = arith.addf %133, %134 : vector<16x128xf32>
    %136 = tpu.iota {dimensions = array<i32: 0>} : vector<2x16xi32>
    %137 = tpu.iota {dimensions = array<i32: 1>} : vector<2x16xi32>
    %c0_i32 = arith.constant 0 : i32
    %138 = vector.broadcast %c0_i32 : i32 to vector<2x16xi32>
    %c0_i32_44 = arith.constant 0 : i32
    %139 = vector.broadcast %c0_i32_44 : i32 to vector<2x16xi32>
    %140 = arith.cmpi eq, %136, %139 : vector<2x16xi32>
    %c0_45 = arith.constant 0 : index
    %141 = memref.load %arg1[%c0_45] : memref<2xi32, #tpu.memory_space<smem>>
    %142 = vector.broadcast %141 : i32 to vector<2x16xi32>
    %143 = arith.select %140, %142, %138 : vector<2x16xi1>, vector<2x16xi32>
    %c1_i32 = arith.constant 1 : i32
    %144 = vector.broadcast %c1_i32 : i32 to vector<2x16xi32>
    %145 = arith.cmpi eq, %136, %144 : vector<2x16xi32>
    %c1 = arith.constant 1 : index
    %146 = memref.load %arg1[%c1] : memref<2xi32, #tpu.memory_space<smem>>
    %147 = vector.broadcast %146 : i32 to vector<2x16xi32>
    %148 = arith.select %145, %147, %143 : vector<2x16xi1>, vector<2x16xi32>
    %149 = arith.cmpi eq, %137, %148 : vector<2x16xi32>
    %cst_46 = arith.constant 1.000000e+00 : f32
    %cst_47 = arith.constant 0.000000e+00 : f32
    %150 = vector.broadcast %cst_46 : f32 to vector<2x16xf32>
    %151 = vector.broadcast %cst_47 : f32 to vector<2x16xf32>
    %152 = arith.select %149, %150, %151 : vector<2x16xi1>, vector<2x16xf32>
    %153 = arith.truncf %152 : vector<2x16xf32> to vector<2x16xbf16>
    %154 = arith.truncf %135 : vector<16x128xf32> to vector<16x128xbf16>
    %cst_48 = arith.constant dense<0.000000e+00> : vector<2x128xf32>
    %155 = tpu.matmul %153, %154, %cst_48 {dimension_numbers = #tpu.dot_dimension_numbers<[1], [0], [0], [1], [0, 0, 1, 1], [], []>} : vector<2x16xbf16>, vector<16x128xbf16>, vector<2x128xf32> -> vector<2x128xf32>
    %156 = arith.truncf %155 : vector<2x128xf32> to vector<2x128xbf16>
    %c0_49 = arith.constant 0 : index
    %c0_50 = arith.constant 0 : index
    %157 = vector.load %arg10[%c0_49, %c0_50] : memref<128x128xbf16, #tpu.memory_space<vmem>>, vector<128x128xbf16>
    %cst_51 = arith.constant dense<0.000000e+00> : vector<2x128xf32>
    %158 = tpu.matmul %156, %157, %cst_51 {dimension_numbers = #tpu.dot_dimension_numbers<[1], [0], [0], [1], [0, 0, 1, 1], [], []>} : vector<2x128xbf16>, vector<128x128xbf16>, vector<2x128xf32> -> vector<2x128xf32>
    %159 = vector.extract_strided_slice %0 {offsets = [10, 0], sizes = [1, 128], strides = [1, 1]} : vector<11x128xf32> to vector<1x128xf32>
    %160 = vector.broadcast %159 : vector<1x128xf32> to vector<2x128xf32>
    %161 = arith.addf %158, %160 : vector<2x128xf32>
    %162 = arith.mulf %161, %161 : vector<2x128xf32>
    %163 = arith.mulf %161, %162 : vector<2x128xf32>
    %cst_52 = arith.constant 4.471500e-02 : f32
    %164 = vector.broadcast %cst_52 : f32 to vector<2x128xf32>
    %165 = arith.mulf %164, %163 : vector<2x128xf32>
    %166 = arith.addf %161, %165 : vector<2x128xf32>
    %cst_53 = arith.constant 0.797884583 : f32
    %167 = vector.broadcast %cst_53 : f32 to vector<2x128xf32>
    %168 = arith.mulf %167, %166 : vector<2x128xf32>
    %169 = math.tanh %168 : vector<2x128xf32>
    %cst_54 = arith.constant 1.000000e+00 : f32
    %170 = vector.broadcast %cst_54 : f32 to vector<2x128xf32>
    %171 = arith.addf %170, %169 : vector<2x128xf32>
    %cst_55 = arith.constant 5.000000e-01 : f32
    %172 = vector.broadcast %cst_55 : f32 to vector<2x128xf32>
    %173 = arith.mulf %172, %171 : vector<2x128xf32>
    %174 = arith.mulf %161, %173 : vector<2x128xf32>
    %175 = vector.extract_strided_slice %0 {offsets = [6, 0], sizes = [1, 128], strides = [1, 1]} : vector<11x128xf32> to vector<1x128xf32>
    %176 = vector.extract_strided_slice %0 {offsets = [7, 0], sizes = [1, 128], strides = [1, 1]} : vector<11x128xf32> to vector<1x128xf32>
    %cst_56 = arith.constant dense<0.000000e+00> : vector<2xf32>
    %177 = vector.multi_reduction <add>, %174, %cst_56 [1] : vector<2x128xf32> to vector<2xf32>
    %178 = vector.shape_cast %177 : vector<2xf32> to vector<2x1xf32>
    %cst_57 = arith.constant 1.280000e+02 : f32
    %179 = vector.broadcast %cst_57 : f32 to vector<2x1xf32>
    %180 = arith.divf %178, %179 : vector<2x1xf32>
    %181 = vector.broadcast %180 : vector<2x1xf32> to vector<2x128xf32>
    %182 = arith.subf %174, %181 : vector<2x128xf32>
    %183 = arith.mulf %182, %182 : vector<2x128xf32>
    %cst_58 = arith.constant dense<0.000000e+00> : vector<2xf32>
    %184 = vector.multi_reduction <add>, %183, %cst_58 [1] : vector<2x128xf32> to vector<2xf32>
    %185 = vector.shape_cast %184 : vector<2xf32> to vector<2x1xf32>
    %cst_59 = arith.constant 1.280000e+02 : f32
    %186 = vector.broadcast %cst_59 : f32 to vector<2x1xf32>
    %187 = arith.divf %185, %186 : vector<2x1xf32>
    %188 = vector.broadcast %180 : vector<2x1xf32> to vector<2x128xf32>
    %189 = arith.subf %174, %188 : vector<2x128xf32>
    %cst_60 = arith.constant 9.99999974E-6 : f32
    %190 = vector.broadcast %cst_60 : f32 to vector<2x1xf32>
    %191 = arith.addf %187, %190 : vector<2x1xf32>
    %192 = math.rsqrt %191 : vector<2x1xf32>
    %193 = vector.broadcast %192 : vector<2x1xf32> to vector<2x128xf32>
    %194 = arith.mulf %189, %193 : vector<2x128xf32>
    %195 = vector.broadcast %175 : vector<1x128xf32> to vector<2x128xf32>
    %196 = arith.mulf %194, %195 : vector<2x128xf32>
    %197 = vector.broadcast %176 : vector<1x128xf32> to vector<2x128xf32>
    %198 = arith.addf %196, %197 : vector<2x128xf32>
    %199 = arith.truncf %198 : vector<2x128xf32> to vector<2x128xbf16>
    %c0_61 = arith.constant 0 : index
    %c0_62 = arith.constant 0 : index
    %200 = vector.load %arg12[%c0_61, %c0_62] : memref<8x128xbf16, #tpu.memory_space<vmem>>, vector<8x128xbf16>
    %cst_63 = arith.constant dense<0.000000e+00> : vector<2x8xf32>
    %201 = tpu.matmul %199, %200, %cst_63 {dimension_numbers = #tpu.dot_dimension_numbers<[1], [1], [0], [0], [0, 0, 1, 0], [], []>} : vector<2x128xbf16>, vector<8x128xbf16>, vector<2x8xf32> -> vector<2x8xf32>
    %c0_64 = arith.constant 0 : index
    %c0_65 = arith.constant 0 : index
    %202 = vector.load %arg13[%c0_64, %c0_65] : memref<1x8xf32, #tpu.memory_space<vmem>>, vector<1x8xf32>
    %203 = vector.broadcast %202 : vector<1x8xf32> to vector<2x8xf32>
    %204 = arith.addf %201, %203 : vector<2x8xf32>
    %205 = vector.extract_strided_slice %204 {offsets = [0, 0], sizes = [1, 4], strides = [1, 1]} : vector<2x8xf32> to vector<1x4xf32>
    %206 = vector.extract_strided_slice %204 {offsets = [1, 4], sizes = [1, 4], strides = [1, 1]} : vector<2x8xf32> to vector<1x4xf32>
    %207 = tpu.concatenate %205, %206 in 0 : vector<1x4xf32>, vector<1x4xf32> -> vector<2x4xf32>
    %c0_66 = arith.constant 0 : index
    %c0_67 = arith.constant 0 : index
    %208 = vector.load %arg14[%c0_66, %c0_67] : memref<2x4xf32, #tpu.memory_space<vmem>>, vector<2x4xf32>
    tpu.vector_store %arg14[%c0_66, %c0_67], %207 {strides = array<i32>} : memref<2x4xf32, #tpu.memory_space<vmem>>, vector<2x4xf32>,
    return
  }
  func.func @transform_0(%arg0: i32, %arg1: memref<2xi32, #tpu.memory_space<smem>>) -> (i32, i32) {
    %c0_i32 = arith.constant 0 : i32
    %c0_i32_0 = arith.constant 0 : i32
    %c0_i32_1 = arith.constant 0 : i32
    return %c0_i32, %c0_i32_0 : i32, i32
  }
  func.func @transform_1(%arg0: i32, %arg1: memref<2xi32, #tpu.memory_space<smem>>) -> (i32, i32) {
    %c0_i32 = arith.constant 0 : i32
    %c0_i32_0 = arith.constant 0 : i32
    %c0_i32_1 = arith.constant 0 : i32
    return %c0_i32, %c0_i32_0 : i32, i32
  }
  func.func @transform_2(%arg0: i32, %arg1: memref<2xi32, #tpu.memory_space<smem>>) -> (i32, i32) {
    %c0_i32 = arith.constant 0 : i32
    %c0_i32_0 = arith.constant 0 : i32
    %c0_i32_1 = arith.constant 0 : i32
    return %c0_i32, %c0_i32_0 : i32, i32
  }
  func.func @transform_3(%arg0: i32, %arg1: memref<2xi32, #tpu.memory_space<smem>>) -> (i32, i32) {
    %c0_i32 = arith.constant 0 : i32
    %c0_i32_0 = arith.constant 0 : i32
    %c0_i32_1 = arith.constant 0 : i32
    return %c0_i32, %c0_i32_0 : i32, i32
  }
  func.func @transform_4(%arg0: i32, %arg1: memref<2xi32, #tpu.memory_space<smem>>) -> (i32, i32) {
    %c0_i32 = arith.constant 0 : i32
    %c0_i32_0 = arith.constant 0 : i32
    %c0_i32_1 = arith.constant 0 : i32
    return %c0_i32, %c0_i32_0 : i32, i32
  }
  func.func @transform_5(%arg0: i32, %arg1: memref<2xi32, #tpu.memory_space<smem>>) -> (i32, i32) {
    %c0_i32 = arith.constant 0 : i32
    %c0_i32_0 = arith.constant 0 : i32
    %c0_i32_1 = arith.constant 0 : i32
    return %c0_i32, %c0_i32_0 : i32, i32
  }
  func.func @transform_6(%arg0: i32, %arg1: memref<2xi32, #tpu.memory_space<smem>>) -> (i32, i32) {
    %c0_i32 = arith.constant 0 : i32
    %c0_i32_0 = arith.constant 0 : i32
    %c0_i32_1 = arith.constant 0 : i32
    return %c0_i32, %c0_i32_0 : i32, i32
  }
  func.func @transform_7(%arg0: i32, %arg1: memref<2xi32, #tpu.memory_space<smem>>) -> (i32, i32) {
    %c0_i32 = arith.constant 0 : i32
    %c0_i32_0 = arith.constant 0 : i32
    %c0_i32_1 = arith.constant 0 : i32
    return %c0_i32, %c0_i32_0 : i32, i32
  }
  func.func @transform_8(%arg0: i32, %arg1: memref<2xi32, #tpu.memory_space<smem>>) -> (i32, i32) {
    %c0_i32 = arith.constant 0 : i32
    %c0_i32_0 = arith.constant 0 : i32
    %c0_i32_1 = arith.constant 0 : i32
    return %c0_i32, %c0_i32_0 : i32, i32
  }
  func.func @transform_9(%arg0: i32, %arg1: memref<2xi32, #tpu.memory_space<smem>>) -> (i32, i32) {
    %c0_i32 = arith.constant 0 : i32
    %c0_i32_0 = arith.constant 0 : i32
    %c0_i32_1 = arith.constant 0 : i32
    return %c0_i32, %c0_i32_0 : i32, i32
  }
  func.func @transform_10(%arg0: i32, %arg1: memref<2xi32, #tpu.memory_space<smem>>) -> (i32, i32) {
    %c0_i32 = arith.constant 0 : i32
    %c0_i32_0 = arith.constant 0 : i32
    %c0_i32_1 = arith.constant 0 : i32
    return %c0_i32, %c0_i32_0 : i32, i32
  }
  func.func @transform_11(%arg0: i32, %arg1: memref<2xi32, #tpu.memory_space<smem>>) -> (i32, i32) {
    %c0_i32 = arith.constant 0 : i32
    %c0_i32_0 = arith.constant 0 : i32
    %c0_i32_1 = arith.constant 0 : i32
    return %c0_i32, %c0_i32_0 : i32, i32
  }
  func.func @transform_12(%arg0: i32, %arg1: memref<2xi32, #tpu.memory_space<smem>>) -> (i32, i32) {
    %c0_i32 = arith.constant 0 : i32
    %c0_i32_0 = arith.constant 0 : i32
    %c0_i32_1 = arith.constant 0 : i32
    return %c0_i32, %c0_i32_0 : i32, i32
  }
}

</mosaic_0001>

<llo_original>
// kernel: mcq_filler_forward.1
$region0: #{mcq_filler_forward.1}
  #allocation0 [shape = 'u32[]', space=smem, size = 0x4, offset = 0x4, fixed_abs, tag = 'smem constant byte address 0x4 - core index']
  #allocation1 [shape = 'u32[72,128]{1,0:T(1,128)}', space=vmem, size = 0x9000, scoped, tag = 'internal scratch']
  #allocation2 [shape = 's32[1]{0}', space=sflag, size = 0x4, scoped, tag = 'scoped memory for mcq_filler_forward.1']
  #allocation3 [shape = 'u8[512]{0}', space=smem, size = 0x200, scoped, tag = 'prefetched SMEM operand 0']
  %s0 = inlined_call_operand.vmem [shape: s32[2], index: 0, kind: input, shape index: {}]
  %s1 = inlined_call_operand.vmem [shape: f32[16,128], index: 1, kind: input, shape index: {}]
  %s2 = inlined_call_operand.vmem [shape: f32[16,16], index: 2, kind: input, shape index: {}]
  %s3 = inlined_call_operand.vmem [shape: bf16[128,384], index: 3, kind: input, shape index: {}]
  %s4 = inlined_call_operand.vmem [shape: f32[1,384], index: 4, kind: input, shape index: {}]
  %s5 = inlined_call_operand.vmem [shape: bf16[128,128], index: 5, kind: input, shape index: {}]
  %s6 = inlined_call_operand.vmem [shape: bf16[128,256], index: 6, kind: input, shape index: {}]
  %s7 = inlined_call_operand.vmem [shape: f32[1,256], index: 7, kind: input, shape index: {}]
  %s8 = inlined_call_operand.vmem [shape: bf16[256,128], index: 8, kind: input, shape index: {}]
  %s9 = inlined_call_operand.vmem [shape: bf16[128,128], index: 9, kind: input, shape index: {}]
  %s10 = inlined_call_operand.vmem [shape: f32[11,128], index: 10, kind: input, shape index: {}]
  %s11 = inlined_call_operand.vmem [shape: bf16[8,128], index: 11, kind: input, shape index: {}]
  %s12 = inlined_call_operand.vmem [shape: f32[1,8], index: 12, kind: input, shape index: {}]
  %s13 = inlined_call_operand.hbm [shape: f32[2,4], index: 13, kind: output, shape index: {}]
  %s14 = sld [smem:[#allocation0]]
  $region58: #{mcq_filler_forward.1} parent=0
    _
  %s16 = ssub.s32 1, %s14
  %s17 = scalar_select 0, %s16, %s14
  %s19 = sshll.u32 %s0, 4
  %s20 = int_to_ptr.vmem [resolvable:$true] %s19
  %22 = dma.vmem_to_smem %s20, 16, [#allocation3], [#allocation2]
  %24 = dma.done [#allocation2], 16
  %25 = sfence
  $region1: #{mcq_filler_forward.1} parent=0
    #allocation4 [shape = 'u8[1024]{0}', space=vmem, size = 0x400, scoped, tag = 'output window, operand 0, single buffered']
    #allocation5 [shape = 's32[1]{0}', space=sflag, size = 0x4, scoped, tag = 'scoped memory for mcq_filler_forward.1']
    %26 = vsyncpa [#allocation5], 0
    // Predicated region
    $region2: #{mcq_filler_forward.1} parent=1 // pred_check
      _
    $region3: #{mcq_filler_forward.1} parent=1 // pred_check_branch
      %28 = sbr.rel (0) target = $region5
    $region4: #{mcq_filler_forward.1} parent=1 // pred_region
      _
    $region5: #{mcq_filler_forward.1} parent=1 // pred_fallthru
      _
    // Predicated region
    $region6: #{mcq_filler_forward.1} parent=1 // pred_check
      _
    $region7: #{mcq_filler_forward.1} parent=1 // pred_check_branch
      %30 = sbr.rel (0) target = $region9
    $region8: #{mcq_filler_forward.1} parent=1 // pred_region
      _
    $region9: #{mcq_filler_forward.1} parent=1 // pred_fallthru
      _
    // Predicated region
    $region10: #{mcq_filler_forward.1} parent=1 // pred_check
      _
    $region11: #{mcq_filler_forward.1} parent=1 // pred_check_branch
      %32 = sbr.rel (0) target = $region13
    $region12: #{mcq_filler_forward.1} parent=1 // pred_region
      _
    $region13: #{mcq_filler_forward.1} parent=1 // pred_fallthru
      _
    // Predicated region
    $region14: #{mcq_filler_forward.1} parent=1 // pred_check
      _
    $region15: #{mcq_filler_forward.1} parent=1 // pred_check_branch
      %34 = sbr.rel (0) target = $region17
    $region16: #{mcq_filler_forward.1} parent=1 // pred_region
      _
    $region17: #{mcq_filler_forward.1} parent=1 // pred_fallthru
      _
    // Predicated region
    $region18: #{mcq_filler_forward.1} parent=1 // pred_check
      _
    $region19: #{mcq_filler_forward.1} parent=1 // pred_check_branch
      %36 = sbr.rel (0) target = $region21
    $region20: #{mcq_filler_forward.1} parent=1 // pred_region
      _
    $region21: #{mcq_filler_forward.1} parent=1 // pred_fallthru
      _
    // Predicated region
    $region22: #{mcq_filler_forward.1} parent=1 // pred_check
      _
    $region23: #{mcq_filler_forward.1} parent=1 // pred_check_branch
      %38 = sbr.rel (0) target = $region25
    $region24: #{mcq_filler_forward.1} parent=1 // pred_region
      _
    $region25: #{mcq_filler_forward.1} parent=1 // pred_fallthru
      _
    // Predicated region
    $region26: #{mcq_filler_forward.1} parent=1 // pred_check
      _
    $region27: #{mcq_filler_forward.1} parent=1 // pred_check_branch
      %40 = sbr.rel (0) target = $region29
    $region28: #{mcq_filler_forward.1} parent=1 // pred_region
      _
    $region29: #{mcq_filler_forward.1} parent=1 // pred_fallthru
      _
    // Predicated region
    $region30: #{mcq_filler_forward.1} parent=1 // pred_check
      _
    $region31: #{mcq_filler_forward.1} parent=1 // pred_check_branch
      %42 = sbr.rel (0) target = $region33
    $region32: #{mcq_filler_forward.1} parent=1 // pred_region
      _
    $region33: #{mcq_filler_forward.1} parent=1 // pred_fallthru
      _
    // Predicated region
    $region34: #{mcq_filler_forward.1} parent=1 // pred_check
      _
    $region35: #{mcq_filler_forward.1} parent=1 // pred_check_branch
      %44 = sbr.rel (0) target = $region37
    $region36: #{mcq_filler_forward.1} parent=1 // pred_region
      _
    $region37: #{mcq_filler_forward.1} parent=1 // pred_fallthru
      _
    // Predicated region
    $region38: #{mcq_filler_forward.1} parent=1 // pred_check
      _
    $region39: #{mcq_filler_forward.1} parent=1 // pred_check_branch
      %46 = sbr.rel (0) target = $region41
    $region40: #{mcq_filler_forward.1} parent=1 // pred_region
      _
    $region41: #{mcq_filler_forward.1} parent=1 // pred_fallthru
      _
    // Predicated region
    $region42: #{mcq_filler_forward.1} parent=1 // pred_check
      _
    $region43: #{mcq_filler_forward.1} parent=1 // pred_check_branch
      %48 = sbr.rel (0) target = $region45
    $region44: #{mcq_filler_forward.1} parent=1 // pred_region
      _
    $region45: #{mcq_filler_forward.1} parent=1 // pred_fallthru
      _
    // Predicated region
    $region46: #{mcq_filler_forward.1} parent=1 // pred_check
      _
    $region47: #{mcq_filler_forward.1} parent=1 // pred_check_branch
      %50 = sbr.rel (0) target = $region49
    $region48: #{mcq_filler_forward.1} parent=1 // pred_region
      _
    $region49: #{mcq_filler_forward.1} parent=1 // pred_fallthru
      _
    %v52 = vld [vmem:[%s10] sm:$0xff]
    %v53 = vld [vmem:[%s10 + $0x8] sm:$0x7]
    %v54 = vld [vmem:[%s1] sm:$0xff]
    %v55 = vld [vmem:[%s1 + $0x8] sm:$0xff]
    %56 = vadd.xlane.f32.xlu0 %v54
    %v57 = vpop.xlane.xlu0 %56
    %58 = vadd.xlane.f32.xlu0 %v55
    %v59 = vpop.xlane.xlu0 %58
    %v60 = vrcp.pop 128.0
    %v61 = vmul.f32 128.0, %v60
    %v62 = vsub.f32 1.0, %v61
    %v63 = vmul.f32 %v60, %v62
    %v64 = vadd.f32 %v60, %v63
    %vm65 = vweird.f32 %v60
    %v66 = vsel %vm65, %v60, %v64
    %v67 = vmul.f32 %v57, %v66
    %v68 = vmul.f32 %v59, %v66
    %v69 = vsub.f32 %v54, %v67
    %v70 = vsub.f32 %v55, %v68
    %v71 = vmul.f32 %v69, %v69
    %v72 = vmul.f32 %v70, %v70
    %73 = vadd.xlane.f32.xlu0 %v71
    %v74 = vpop.xlane.xlu0 %73
    %75 = vadd.xlane.f32.xlu0 %v72
    %v76 = vpop.xlane.xlu0 %75
    %v77 = vmul.f32 %v74, %v66
    %v78 = vmul.f32 %v76, %v66
    %v79 = vadd.f32 %v77, 1e-05
    %v80 = vadd.f32 %v78, 1e-05
    %v81 = vrsqrt.pop %v79
    %v82 = vmul.f32 %v81, %v79
    %v83 = vmul.f32 %v82, %v81
    %v84 = vmul.f32 0.5, %v83
    %v85 = vsub.f32 1.5, %v84
    %v86 = vmul.f32 %v81, %v85
    %vm87 = vweird.f32 %v79
    %vm88 = vweird.f32 %v81
    %vm89 = vmor %vm87, %vm88
    %v90 = vsel %vm89, %v81, %v86
    %v91 = vrsqrt.pop %v80
    %v92 = vmul.f32 %v91, %v80
    %v93 = vmul.f32 %v92, %v91
    %v94 = vmul.f32 0.5, %v93
    %v95 = vsub.f32 1.5, %v94
    %v96 = vmul.f32 %v91, %v95
    %vm97 = vweird.f32 %v80
    %vm98 = vweird.f32 %v91
    %vm99 = vmor %vm97, %vm98
    %v100 = vsel %vm99, %v91, %v96
    %v101 = vmul.f32 %v69, %v90
    %v102 = vmul.f32 %v70, %v100
    %v103 = vperm.slane %v52, 0
    %v104 = vmul.f32 %v101, %v103
    %v105 = vmul.f32 %v102, %v103
    %v106 = vperm.slane %v52, 1
    %v107 = vadd.f32 %v104, %v106
    %v108 = vadd.f32 %v105, %v106
    %v109 = vpack.c.bf16 %v108, %v107
    %v110 = vld [vmem:[%s3] sm:$0xff]
    %v111 = vld [vmem:[%s3 + $0x8] sm:$0xf]
    %v112 = vld [vmem:[%s3 + $0xc] sm:$0xff]
    %v113 = vld [vmem:[%s3 + $0x14] sm:$0xf]
    %v114 = vld [vmem:[%s3 + $0x18] sm:$0xff]
    %v115 = vld [vmem:[%s3 + $0x20] sm:$0xf]
    %v116 = vld [vmem:[%s3 + $0x24] sm:$0xff]
    %v117 = vld [vmem:[%s3 + $0x2c] sm:$0xf]
    %v118 = vld [vmem:[%s3 + $0x30] sm:$0xff]
    %v119 = vld [vmem:[%s3 + $0x38] sm:$0xf]
    %v120 = vld [vmem:[%s3 + $0x3c] sm:$0xff]
    %v121 = vld [vmem:[%s3 + $0x44] sm:$0xf]
    %v122 = vld [vmem:[%s3 + $0x48] sm:$0xff]
    %v123 = vld [vmem:[%s3 + $0x50] sm:$0xf]
    %v124 = vld [vmem:[%s3 + $0x54] sm:$0xff]
    %v125 = vld [vmem:[%s3 + $0x5c] sm:$0xf]
    %v126 = vld [vmem:[%s3 + $0x60] sm:$0xff]
    %v127 = vld [vmem:[%s3 + $0x68] sm:$0xf]
    %v128 = vld [vmem:[%s3 + $0x6c] sm:$0xff]
    %v129 = vld [vmem:[%s3 + $0x74] sm:$0xf]
    %v130 = vld [vmem:[%s3 + $0x78] sm:$0xff]
    %v131 = vld [vmem:[%s3 + $0x80] sm:$0xf]
    %v132 = vld [vmem:[%s3 + $0x84] sm:$0xff]
    %v133 = vld [vmem:[%s3 + $0x8c] sm:$0xf]
    %v134 = vld [vmem:[%s3 + $0x90] sm:$0xff]
    %v135 = vld [vmem:[%s3 + $0x98] sm:$0xf]
    %v136 = vld [vmem:[%s3 + $0x9c] sm:$0xff]
    %v137 = vld [vmem:[%s3 + $0xa4] sm:$0xf]
    %v138 = vld [vmem:[%s3 + $0xa8] sm:$0xff]
    %v139 = vld [vmem:[%s3 + $0xb0] sm:$0xf]
    %v140 = vld [vmem:[%s3 + $0xb4] sm:$0xff]
    %v141 = vld [vmem:[%s3 + $0xbc] sm:$0xf]
    %v142 = vld [vmem:[%s4] sm:$0x7]
    %v144 = vperm.slane %v142, 0
    %v145 = vperm.slane %v142, 1
    %v146 = vperm.slane %v142, 2
    %v182 = vunpack.c.l.b16 %v110
    %v183 = vunpack.c.h.b16 %v110
    %v184 = vunpack.c.l.b16 %v111
    %v185 = vunpack.c.l.b16 %v112
    %v186 = vunpack.c.h.b16 %v112
    %v187 = vunpack.c.l.b16 %v113
    %v188 = vunpack.c.l.b16 %v114
    %v189 = vunpack.c.h.b16 %v114
    %v190 = vunpack.c.l.b16 %v115
    %v191 = vunpack.c.l.b16 %v116
    %v192 = vunpack.c.h.b16 %v116
    %v193 = vunpack.c.l.b16 %v117
    %v194 = vunpack.c.l.b16 %v118
    %v195 = vunpack.c.h.b16 %v118
    %v196 = vunpack.c.l.b16 %v119
    %v197 = vunpack.c.l.b16 %v120
    %v198 = vunpack.c.h.b16 %v120
    %v199 = vunpack.c.l.b16 %v121
    %v200 = vunpack.c.l.b16 %v122
    %v201 = vunpack.c.h.b16 %v122
    %v202 = vunpack.c.l.b16 %v123
    %v203 = vunpack.c.l.b16 %v124
    %v204 = vunpack.c.h.b16 %v124
    %v205 = vunpack.c.l.b16 %v125
    %v206 = vunpack.c.l.b16 %v126
    %v207 = vunpack.c.h.b16 %v126
    %v208 = vunpack.c.l.b16 %v127
    %v209 = vunpack.c.l.b16 %v128
    %v210 = vunpack.c.h.b16 %v128
    %v211 = vunpack.c.l.b16 %v129
    %v212 = vunpack.c.l.b16 %v130
    %v213 = vunpack.c.h.b16 %v130
    %v214 = vunpack.c.l.b16 %v131
    %v215 = vunpack.c.l.b16 %v132
    %v216 = vunpack.c.h.b16 %v132
    %v217 = vunpack.c.l.b16 %v133
    %v218 = vunpack.c.l.b16 %v134
    %v219 = vunpack.c.h.b16 %v134
    %v220 = vunpack.c.l.b16 %v135
    %v221 = vunpack.c.l.b16 %v136
    %v222 = vunpack.c.h.b16 %v136
    %v223 = vunpack.c.l.b16 %v137
    %v224 = vunpack.c.l.b16 %v138
    %v225 = vunpack.c.h.b16 %v138
    %v226 = vunpack.c.l.b16 %v139
    %v227 = vunpack.c.l.b16 %v140
    %v228 = vunpack.c.h.b16 %v140
    %v229 = vunpack.c.l.b16 %v141
    %v230 = vpack.c.b16 %v185, %v182
    %v231 = vpack.c.b16 %v186, %v183
    %v232 = vpack.c.b16 %v187, %v184
    %v233 = vpack.c.b16 %v191, %v188
    %v234 = vpack.c.b16 %v192, %v189
    %v235 = vpack.c.b16 %v193, %v190
    %v236 = vpack.c.b16 %v197, %v194
    %v237 = vpack.c.b16 %v198, %v195
    %v238 = vpack.c.b16 %v199, %v196
    %v239 = vpack.c.b16 %v203, %v200
    %v240 = vpack.c.b16 %v204, %v201
    %v241 = vpack.c.b16 %v205, %v202
    %v242 = vpack.c.b16 %v209, %v206
    %v243 = vpack.c.b16 %v210, %v207
    %v244 = vpack.c.b16 %v211, %v208
    %v245 = vpack.c.b16 %v215, %v212
    %v246 = vpack.c.b16 %v216, %v213
    %v247 = vpack.c.b16 %v217, %v214
    %v248 = vpack.c.b16 %v221, %v218
    %v249 = vpack.c.b16 %v222, %v219
    %v250 = vpack.c.b16 %v223, %v220
    %v251 = vpack.c.b16 %v227, %v224
    %v252 = vpack.c.b16 %v228, %v225
    %v253 = vpack.c.b16 %v229, %v226
    %278 = vmatpush.bf16.msra.mxu0 %v251
    %279 = vmatpush.bf16.msra.mxu0 %v248
    %280 = vmatpush.bf16.msra.mxu0 %v245
    %281 = vmatpush.bf16.msra.mxu0 %v242
    %282 = vmatpush.bf16.msra.mxu0 %v239
    %283 = vmatpush.bf16.msra.mxu0 %v236
    %284 = vmatpush.bf16.msra.mxu0 %v233
    %285 = vmatpush.bf16.msra.mxu0 %v230
    %286 = vmatmul.bf16.gmra.mxu0 %v109
    %v287 = vpop.f32.mrf.mxu0
    %v288 = vadd.f32 %v144, %v287
    %v289 = vpop.f32.mrf.mxu0
    %v290 = vadd.f32 %v144, %v289
    %291 = vdwg.mxu0
    %292 = vmatpush.bf16.msra.mxu0 %v252
    %293 = vmatpush.bf16.msra.mxu0 %v249
    %294 = vmatpush.bf16.msra.mxu0 %v246
    %295 = vmatpush.bf16.msra.mxu0 %v243
    %296 = vmatpush.bf16.msra.mxu0 %v240
    %297 = vmatpush.bf16.msra.mxu0 %v237
    %298 = vmatpush.bf16.msra.mxu0 %v234
    %299 = vmatpush.bf16.msra.mxu0 %v231
    %300 = vmatmul.bf16.gmra.mxu0 %v109
    %v301 = vpop.f32.mrf.mxu0
    %v302 = vadd.f32 %v145, %v301
    %v303 = vpop.f32.mrf.mxu0
    %v304 = vadd.f32 %v145, %v303
    %305 = vdwg.mxu0
    %306 = vmatpush.bf16.msra.mxu0 %v253
    %307 = vmatpush.bf16.msra.mxu0 %v250
    %308 = vmatpush.bf16.msra.mxu0 %v247
    %309 = vmatpush.bf16.msra.mxu0 %v244
    %310 = vmatpush.bf16.msra.mxu0 %v241
    %311 = vmatpush.bf16.msra.mxu0 %v238
    %312 = vmatpush.bf16.msra.mxu0 %v235
    %313 = vmatpush.bf16.msra.mxu0 %v232
    %314 = vmatmul.bf16.gmra.mxu0 %v109
    %v315 = vpop.f32.mrf.mxu0
    %v316 = vadd.f32 %v146, %v315
    %v317 = vpop.f32.mrf.mxu0
    %v318 = vadd.f32 %v146, %v317
    %319 = vdwg.mxu0
    %v320 = vpack.c.bf16 %v290, %v288
    %v321 = vpack.c.bf16 %v304, %v302
    %v322 = vpack.c.bf16 %v318, %v316
    %323 = vmatpush.bf16.xpose.msra.mxu0 0
    %324 = vmatpush.bf16.xpose.msra.mxu0 0
    %325 = vmatpush.bf16.xpose.msra.mxu0 0
    %326 = vmatpush.bf16.xpose.msra.mxu0 0
    %327 = vmatpush.bf16.xpose.msra.mxu0 0
    %328 = vmatpush.bf16.xpose.msra.mxu0 0
    %329 = vmatpush.bf16.xpose.msra.mxu0 0
    %330 = vmatpush.bf16.xpose.msra.mxu0 %v321
    %331 = vmatmul.bf16.gmra.mxu0 %v320
    %v332 = vpop.f32.mrf.mxu0
    %v333 = vadd.f32 0.0, %v332
    %v334 = vpop.f32.mrf.mxu0
    %v335 = vadd.f32 0.0, %v334
    %336 = vdwg.mxu0
    %v337 = vmul.f32 %v333, 0.088388346
    %v338 = vmul.f32 %v335, 0.088388346
    %v339 = vld [vmem:[%s2] sm:$0xff]
    %v340 = vld [vmem:[%s2 + $0x8] sm:$0xff]
    %v341 = vadd.f32 %v337, %v339
    %v342 = vadd.f32 %v338, %v340
    %vm343 = vcmask 130048
    %v344 = vsel %vm343, %v341, -inf
    %345 = vmax.xlane.f32.xlu0 %v344
    %v346 = vpop.xlane.xlu0 %345
    %v347 = vsel %vm343, %v342, -inf
    %348 = vmax.xlane.f32.xlu0 %v347
    %v349 = vpop.xlane.xlu0 %348
    %v350 = vsub.f32 %v341, %v346
    %v351 = vsub.f32 %v342, %v349
    %v352 = vmul.f32 %v350, 1.442695
    %v353 = vpow.pop %v352
    %v354 = vmul.f32 %v351, 1.442695
    %v355 = vpow.pop %v354
    %v356 = vsel %vm343, %v353, 0.0
    %357 = vadd.xlane.f32.xlu0 %v356
    %v358 = vpop.xlane.xlu0 %357
    %v359 = vsel %vm343, %v355, 0.0
    %360 = vadd.xlane.f32.xlu0 %v359
    %v361 = vpop.xlane.xlu0 %360
    %v362 = vrcp.pop %v358
    %v363 = vrcp.pop %v361
    %v364 = vmul.f32 %v353, %v362
    %v365 = vmul.f32 %v355, %v363
    %v366 = vpack.c.bf16 %v365, %v364
    %v368 = vsel %vm343, %v366, 0
    %370 = vmatpush.bf16.msra.mxu0 0
    %371 = vmatpush.bf16.msra.mxu0 0
    %372 = vmatpush.bf16.msra.mxu0 0
    %373 = vmatpush.bf16.msra.mxu0 0
    %374 = vmatpush.bf16.msra.mxu0 0
    %375 = vmatpush.bf16.msra.mxu0 0
    %376 = vmatpush.bf16.msra.mxu0 0
    %377 = vmatpush.bf16.msra.mxu0 %v322
    %378 = vmatmul.bf16.gmra.mxu0 %v368
    %v379 = vpop.f32.mrf.mxu0
    %v380 = vadd.f32 0.0, %v379
    %v381 = vpop.f32.mrf.mxu0
    %v382 = vadd.f32 0.0, %v381
    %383 = vdwg.mxu0
    %v384 = vpack.c.bf16 %v382, %v380
    %v385 = vld [vmem:[%s5] sm:$0xf]
    %v386 = vld [vmem:[%s5 + $0x4] sm:$0xf]
    %v387 = vld [vmem:[%s5 + $0x8] sm:$0xf]
    %v388 = vld [vmem:[%s5 + $0xc] sm:$0xf]
    %v389 = vld [vmem:[%s5 + $0x10] sm:$0xf]
    %v390 = vld [vmem:[%s5 + $0x14] sm:$0xf]
    %v391 = vld [vmem:[%s5 + $0x18] sm:$0xf]
    %v392 = vld [vmem:[%s5 + $0x1c] sm:$0xf]
    %v393 = vld [vmem:[%s5 + $0x20] sm:$0xf]
    %v394 = vld [vmem:[%s5 + $0x24] sm:$0xf]
    %v395 = vld [vmem:[%s5 + $0x28] sm:$0xf]
    %v396 = vld [vmem:[%s5 + $0x2c] sm:$0xf]
    %v397 = vld [vmem:[%s5 + $0x30] sm:$0xf]
    %v398 = vld [vmem:[%s5 + $0x34] sm:$0xf]
    %v399 = vld [vmem:[%s5 + $0x38] sm:$0xf]
    %v400 = vld [vmem:[%s5 + $0x3c] sm:$0xf]
    %v401 = vperm.slane %v53, 0
    %v418 = vunpack.c.l.b16 %v385
    %v419 = vunpack.c.l.b16 %v386
    %v420 = vunpack.c.l.b16 %v387
    %v421 = vunpack.c.l.b16 %v388
    %v422 = vunpack.c.l.b16 %v389
    %v423 = vunpack.c.l.b16 %v390
    %v424 = vunpack.c.l.b16 %v391
    %v425 = vunpack.c.l.b16 %v392
    %v426 = vunpack.c.l.b16 %v393
    %v427 = vunpack.c.l.b16 %v394
    %v428 = vunpack.c.l.b16 %v395
    %v429 = vunpack.c.l.b16 %v396
    %v430 = vunpack.c.l.b16 %v397
    %v431 = vunpack.c.l.b16 %v398
    %v432 = vunpack.c.l.b16 %v399
    %v433 = vunpack.c.l.b16 %v400
    %v434 = vpack.c.b16 %v419, %v418
    %v435 = vpack.c.b16 %v421, %v420
    %v436 = vpack.c.b16 %v423, %v422
    %v437 = vpack.c.b16 %v425, %v424
    %v438 = vpack.c.b16 %v427, %v426
    %v439 = vpack.c.b16 %v429, %v428
    %v440 = vpack.c.b16 %v431, %v430
    %v441 = vpack.c.b16 %v433, %v432
    %450 = vmatpush.bf16.msra.mxu0 %v441
    %451 = vmatpush.bf16.msra.mxu0 %v440
    %452 = vmatpush.bf16.msra.mxu0 %v439
    %453 = vmatpush.bf16.msra.mxu0 %v438
    %454 = vmatpush.bf16.msra.mxu0 %v437
    %455 = vmatpush.bf16.msra.mxu0 %v436
    %456 = vmatpush.bf16.msra.mxu0 %v435
    %457 = vmatpush.bf16.msra.mxu0 %v434
    %458 = vmatmul.bf16.gmra.mxu0 %v384
    %v459 = vpop.f32.mrf.mxu0
    %v460 = vadd.f32 %v401, %v459
    %v461 = vpop.f32.mrf.mxu0
    %v462 = vadd.f32 %v401, %v461
    %463 = vdwg.mxu0
    %v464 = vadd.f32 %v107, %v460
    %v465 = vadd.f32 %v108, %v462
    %466 = vadd.xlane.f32.xlu0 %v464
    %v467 = vpop.xlane.xlu0 %466
    %468 = vadd.xlane.f32.xlu0 %v465
    %v469 = vpop.xlane.xlu0 %468
    %v470 = vmul.f32 %v467, %v66
    %v471 = vmul.f32 %v469, %v66
    %v472 = vsub.f32 %v464, %v470
    %v473 = vsub.f32 %v465, %v471
    %v474 = vmul.f32 %v472, %v472
    %v475 = vmul.f32 %v473, %v473
    %476 = vadd.xlane.f32.xlu0 %v474
    %v477 = vpop.xlane.xlu0 %476
    %478 = vadd.xlane.f32.xlu0 %v475
    %v479 = vpop.xlane.xlu0 %478
    %v480 = vmul.f32 %v477, %v66
    %v481 = vmul.f32 %v479, %v66
    %v482 = vadd.f32 %v480, 1e-05
    %v483 = vadd.f32 %v481, 1e-05
    %v484 = vrsqrt.pop %v482
    %v485 = vmul.f32 %v484, %v482
    %v486 = vmul.f32 %v485, %v484
    %v487 = vmul.f32 0.5, %v486
    %v488 = vsub.f32 1.5, %v487
    %v489 = vmul.f32 %v484, %v488
    %vm490 = vweird.f32 %v482
    %vm491 = vweird.f32 %v484
    %vm492 = vmor %vm490, %vm491
    %v493 = vsel %vm492, %v484, %v489
    %v494 = vrsqrt.pop %v483
    %v495 = vmul.f32 %v494, %v483
    %v496 = vmul.f32 %v495, %v494
    %v497 = vmul.f32 0.5, %v496
    %v498 = vsub.f32 1.5, %v497
    %v499 = vmul.f32 %v494, %v498
    %vm500 = vweird.f32 %v483
    %vm501 = vweird.f32 %v494
    %vm502 = vmor %vm500, %vm501
    %v503 = vsel %vm502, %v494, %v499
    %v504 = vmul.f32 %v472, %v493
    %v505 = vmul.f32 %v473, %v503
    %v506 = vperm.slane %v52, 2
    %v507 = vmul.f32 %v504, %v506
    %v508 = vmul.f32 %v505, %v506
    %v509 = vperm.slane %v52, 3
    %v510 = vadd.f32 %v507, %v509
    %v511 = vadd.f32 %v508, %v509
    %v512 = vpack.c.bf16 %v511, %v510
    %v513 = vld [vmem:[%s6] sm:$0xff]
    %v514 = vld [vmem:[%s6 + $0x8] sm:$0xff]
    %v515 = vld [vmem:[%s6 + $0x10] sm:$0xff]
    %v516 = vld [vmem:[%s6 + $0x18] sm:$0xff]
    %v517 = vld [vmem:[%s6 + $0x20] sm:$0xff]
    %v518 = vld [vmem:[%s6 + $0x28] sm:$0xff]
    %v519 = vld [vmem:[%s6 + $0x30] sm:$0xff]
    %v520 = vld [vmem:[%s6 + $0x38] sm:$0xff]
    %v521 = vld [vmem:[%s6 + $0x40] sm:$0xff]
    %v522 = vld [vmem:[%s6 + $0x48] sm:$0xff]
    %v523 = vld [vmem:[%s6 + $0x50] sm:$0xff]
    %v524 = vld [vmem:[%s6 + $0x58] sm:$0xff]
    %v525 = vld [vmem:[%s6 + $0x60] sm:$0xff]
    %v526 = vld [vmem:[%s6 + $0x68] sm:$0xff]
    %v527 = vld [vmem:[%s6 + $0x70] sm:$0xff]
    %v528 = vld [vmem:[%s6 + $0x78] sm:$0xff]
    %v529 = vld [vmem:[%s7] sm:$0x3]
    %v531 = vperm.slane %v529, 0
    %v532 = vperm.slane %v529, 1
    %v551 = vunpack.c.l.b16 %v513
    %v552 = vunpack.c.h.b16 %v513
    %v553 = vunpack.c.l.b16 %v514
    %v554 = vunpack.c.h.b16 %v514
    %v555 = vunpack.c.l.b16 %v515
    %v556 = vunpack.c.h.b16 %v515
    %v557 = vunpack.c.l.b16 %v516
    %v558 = vunpack.c.h.b16 %v516
    %v559 = vunpack.c.l.b16 %v517
    %v560 = vunpack.c.h.b16 %v517
    %v561 = vunpack.c.l.b16 %v518
    %v562 = vunpack.c.h.b16 %v518
    %v563 = vunpack.c.l.b16 %v519
    %v564 = vunpack.c.h.b16 %v519
    %v565 = vunpack.c.l.b16 %v520
    %v566 = vunpack.c.h.b16 %v520
    %v567 = vunpack.c.l.b16 %v521
    %v568 = vunpack.c.h.b16 %v521
    %v569 = vunpack.c.l.b16 %v522
    %v570 = vunpack.c.h.b16 %v522
    %v571 = vunpack.c.l.b16 %v523
    %v572 = vunpack.c.h.b16 %v523
    %v573 = vunpack.c.l.b16 %v524
    %v574 = vunpack.c.h.b16 %v524
    %v575 = vunpack.c.l.b16 %v525
    %v576 = vunpack.c.h.b16 %v525
    %v577 = vunpack.c.l.b16 %v526
    %v578 = vunpack.c.h.b16 %v526
    %v579 = vunpack.c.l.b16 %v527
    %v580 = vunpack.c.h.b16 %v527
    %v581 = vunpack.c.l.b16 %v528
    %v582 = vunpack.c.h.b16 %v528
    %v583 = vpack.c.b16 %v553, %v551
    %v584 = vpack.c.b16 %v554, %v552
    %v585 = vpack.c.b16 %v557, %v555
    %v586 = vpack.c.b16 %v558, %v556
    %v587 = vpack.c.b16 %v561, %v559
    %v588 = vpack.c.b16 %v562, %v560
    %v589 = vpack.c.b16 %v565, %v563
    %v590 = vpack.c.b16 %v566, %v564
    %v591 = vpack.c.b16 %v569, %v567
    %v592 = vpack.c.b16 %v570, %v568
    %v593 = vpack.c.b16 %v573, %v571
    %v594 = vpack.c.b16 %v574, %v572
    %v595 = vpack.c.b16 %v577, %v575
    %v596 = vpack.c.b16 %v578, %v576
    %v597 = vpack.c.b16 %v581, %v579
    %v598 = vpack.c.b16 %v582, %v580
    %615 = vmatpush.bf16.msra.mxu0 %v597
    %616 = vmatpush.bf16.msra.mxu0 %v595
    %617 = vmatpush.bf16.msra.mxu0 %v593
    %618 = vmatpush.bf16.msra.mxu0 %v591
    %619 = vmatpush.bf16.msra.mxu0 %v589
    %620 = vmatpush.bf16.msra.mxu0 %v587
    %621 = vmatpush.bf16.msra.mxu0 %v585
    %622 = vmatpush.bf16.msra.mxu0 %v583
    %623 = vmatmul.bf16.gmra.mxu0 %v512
    %v624 = vpop.f32.mrf.mxu0
    %v625 = vadd.f32 %v531, %v624
    %v626 = vpop.f32.mrf.mxu0
    %v627 = vadd.f32 %v531, %v626
    %628 = vdwg.mxu0
    %629 = vmatpush.bf16.msra.mxu0 %v598
    %630 = vmatpush.bf16.msra.mxu0 %v596
    %631 = vmatpush.bf16.msra.mxu0 %v594
    %632 = vmatpush.bf16.msra.mxu0 %v592
    %633 = vmatpush.bf16.msra.mxu0 %v590
    %634 = vmatpush.bf16.msra.mxu0 %v588
    %635 = vmatpush.bf16.msra.mxu0 %v586
    %636 = vmatpush.bf16.msra.mxu0 %v584
    %637 = vmatmul.bf16.gmra.mxu0 %v512
    %v638 = vpop.f32.mrf.mxu0
    %v639 = vadd.f32 %v532, %v638
    %v640 = vpop.f32.mrf.mxu0
    %v641 = vadd.f32 %v532, %v640
    %642 = vdwg.mxu0
    %v643 = vmul.f32 %v625, %v625
    %v644 = vmul.f32 %v639, %v639
    %v645 = vmul.f32 %v627, %v627
    %v646 = vmul.f32 %v641, %v641
    %v647 = vmul.f32 %v625, %v643
    %v648 = vmul.f32 %v639, %v644
    %v649 = vmul.f32 %v627, %v645
    %v650 = vmul.f32 %v641, %v646
    %v651 = vmul.f32 %v647, 0.044715
    %v652 = vmul.f32 %v648, 0.044715
    %v653 = vmul.f32 %v649, 0.044715
    %v654 = vmul.f32 %v650, 0.044715
    %v655 = vadd.f32 %v625, %v651
    %v656 = vadd.f32 %v639, %v652
    %v657 = vadd.f32 %v627, %v653
    %v658 = vadd.f32 %v641, %v654
    %v659 = vmul.f32 %v655, 0.7978846
    %v660 = vmul.f32 %v656, 0.7978846
    %v661 = vmul.f32 %v657, 0.7978846
    %v662 = vmul.f32 %v658, 0.7978846
    %v663 = vtanh.pop %v659
    %v664 = vtanh.pop %v660
    %v665 = vtanh.pop %v661
    %v666 = vtanh.pop %v662
    %v667 = vadd.f32 %v663, 1.0
    %v668 = vadd.f32 %v664, 1.0
    %v669 = vadd.f32 %v665, 1.0
    %v670 = vadd.f32 %v666, 1.0
    %v671 = vmul.f32 %v667, 0.5
    %v672 = vmul.f32 %v668, 0.5
    %v673 = vmul.f32 %v669, 0.5
    %v674 = vmul.f32 %v670, 0.5
    %v675 = vmul.f32 %v625, %v671
    %v676 = vmul.f32 %v639, %v672
    %v677 = vmul.f32 %v627, %v673
    %v678 = vmul.f32 %v641, %v674
    %v679 = vpack.c.bf16 %v677, %v675
    %v680 = vpack.c.bf16 %v678, %v676
    %v681 = vld [vmem:[%s8] sm:$0xf]
    %v682 = vld [vmem:[%s8 + $0x4] sm:$0xf]
    %v683 = vld [vmem:[%s8 + $0x8] sm:$0xf]
    %v684 = vld [vmem:[%s8 + $0xc] sm:$0xf]
    %v685 = vld [vmem:[%s8 + $0x10] sm:$0xf]
    %v686 = vld [vmem:[%s8 + $0x14] sm:$0xf]
    %v687 = vld [vmem:[%s8 + $0x18] sm:$0xf]
    %v688 = vld [vmem:[%s8 + $0x1c] sm:$0xf]
    %v689 = vld [vmem:[%s8 + $0x20] sm:$0xf]
    %v690 = vld [vmem:[%s8 + $0x24] sm:$0xf]
    %v691 = vld [vmem:[%s8 + $0x28] sm:$0xf]
    %v692 = vld [vmem:[%s8 + $0x2c] sm:$0xf]
    %v693 = vld [vmem:[%s8 + $0x30] sm:$0xf]
    %v694 = vld [vmem:[%s8 + $0x34] sm:$0xf]
    %v695 = vld [vmem:[%s8 + $0x38] sm:$0xf]
    %v696 = vld [vmem:[%s8 + $0x3c] sm:$0xf]
    %v697 = vld [vmem:[%s8 + $0x40] sm:$0xf]
    %v698 = vld [vmem:[%s8 + $0x44] sm:$0xf]
    %v699 = vld [vmem:[%s8 + $0x48] sm:$0xf]
    %v700 = vld [vmem:[%s8 + $0x4c] sm:$0xf]
    %v701 = vld [vmem:[%s8 + $0x50] sm:$0xf]
    %v702 = vld [vmem:[%s8 + $0x54] sm:$0xf]
    %v703 = vld [vmem:[%s8 + $0x58] sm:$0xf]
    %v704 = vld [vmem:[%s8 + $0x5c] sm:$0xf]
    %v705 = vld [vmem:[%s8 + $0x60] sm:$0xf]
    %v706 = vld [vmem:[%s8 + $0x64] sm:$0xf]
    %v707 = vld [vmem:[%s8 + $0x68] sm:$0xf]
    %v708 = vld [vmem:[%s8 + $0x6c] sm:$0xf]
    %v709 = vld [vmem:[%s8 + $0x70] sm:$0xf]
    %v710 = vld [vmem:[%s8 + $0x74] sm:$0xf]
    %v711 = vld [vmem:[%s8 + $0x78] sm:$0xf]
    %v712 = vld [vmem:[%s8 + $0x7c] sm:$0xf]
    %v713 = vperm.slane %v53, 1
    %v746 = vunpack.c.l.b16 %v681
    %v747 = vunpack.c.l.b16 %v682
    %v748 = vunpack.c.l.b16 %v683
    %v749 = vunpack.c.l.b16 %v684
    %v750 = vunpack.c.l.b16 %v685
    %v751 = vunpack.c.l.b16 %v686
    %v752 = vunpack.c.l.b16 %v687
    %v753 = vunpack.c.l.b16 %v688
    %v754 = vunpack.c.l.b16 %v689
    %v755 = vunpack.c.l.b16 %v690
    %v756 = vunpack.c.l.b16 %v691
    %v757 = vunpack.c.l.b16 %v692
    %v758 = vunpack.c.l.b16 %v693
    %v759 = vunpack.c.l.b16 %v694
    %v760 = vunpack.c.l.b16 %v695
    %v761 = vunpack.c.l.b16 %v696
    %v762 = vunpack.c.l.b16 %v697
    %v763 = vunpack.c.l.b16 %v698
    %v764 = vunpack.c.l.b16 %v699
    %v765 = vunpack.c.l.b16 %v700
    %v766 = vunpack.c.l.b16 %v701
    %v767 = vunpack.c.l.b16 %v702
    %v768 = vunpack.c.l.b16 %v703
    %v769 = vunpack.c.l.b16 %v704
    %v770 = vunpack.c.l.b16 %v705
    %v771 = vunpack.c.l.b16 %v706
    %v772 = vunpack.c.l.b16 %v707
    %v773 = vunpack.c.l.b16 %v708
    %v774 = vunpack.c.l.b16 %v709
    %v775 = vunpack.c.l.b16 %v710
    %v776 = vunpack.c.l.b16 %v711
    %v777 = vunpack.c.l.b16 %v712
    %v778 = vpack.c.b16 %v747, %v746
    %v779 = vpack.c.b16 %v749, %v748
    %v780 = vpack.c.b16 %v751, %v750
    %v781 = vpack.c.b16 %v753, %v752
    %v782 = vpack.c.b16 %v755, %v754
    %v783 = vpack.c.b16 %v757, %v756
    %v784 = vpack.c.b16 %v759, %v758
    %v785 = vpack.c.b16 %v761, %v760
    %v786 = vpack.c.b16 %v763, %v762
    %v787 = vpack.c.b16 %v765, %v764
    %v788 = vpack.c.b16 %v767, %v766
    %v789 = vpack.c.b16 %v769, %v768
    %v790 = vpack.c.b16 %v771, %v770
    %v791 = vpack.c.b16 %v773, %v772
    %v792 = vpack.c.b16 %v775, %v774
    %v793 = vpack.c.b16 %v777, %v776
    %810 = vmatpush.bf16.msra.mxu0 %v785
    %811 = vmatpush.bf16.msra.mxu0 %v784
    %812 = vmatpush.bf16.msra.mxu0 %v783
    %813 = vmatpush.bf16.msra.mxu0 %v782
    %814 = vmatpush.bf16.msra.mxu0 %v781
    %815 = vmatpush.bf16.msra.mxu0 %v780
    %816 = vmatpush.bf16.msra.mxu0 %v779
    %817 = vmatpush.bf16.msra.mxu0 %v778
    %818 = vmatmul.bf16.gmra.mxu0 %v679
    %v819 = vpop.f32.mrf.mxu0
    %v820 = vadd.f32 %v713, %v819
    %v821 = vpop.f32.mrf.mxu0
    %v822 = vadd.f32 %v713, %v821
    %823 = vdwg.mxu0
    %824 = vmatpush.bf16.msra.mxu0 %v793
    %825 = vmatpush.bf16.msra.mxu0 %v792
    %826 = vmatpush.bf16.msra.mxu0 %v791
    %827 = vmatpush.bf16.msra.mxu0 %v790
    %828 = vmatpush.bf16.msra.mxu0 %v789
    %829 = vmatpush.bf16.msra.mxu0 %v788
    %830 = vmatpush.bf16.msra.mxu0 %v787
    %831 = vmatpush.bf16.msra.mxu0 %v786
    %832 = vmatmul.bf16.gmra.mxu0 %v680
    %v833 = vpop.f32.mrf.mxu0
    %v834 = vadd.f32 %v820, %v833
    %v835 = vpop.f32.mrf.mxu0
    %v836 = vadd.f32 %v822, %v835
    %837 = vdwg.mxu0
    %v838 = vadd.f32 %v510, %v834
    %v839 = vadd.f32 %v511, %v836
    %840 = vadd.xlane.f32.xlu0 %v838
    %v841 = vpop.xlane.xlu0 %840
    %842 = vadd.xlane.f32.xlu0 %v839
    %v843 = vpop.xlane.xlu0 %842
    %v844 = vmul.f32 %v841, %v66
    %v845 = vmul.f32 %v843, %v66
    %v846 = vsub.f32 %v838, %v844
    %v847 = vsub.f32 %v839, %v845
    %v848 = vmul.f32 %v846, %v846
    %v849 = vmul.f32 %v847, %v847
    %850 = vadd.xlane.f32.xlu0 %v848
    %v851 = vpop.xlane.xlu0 %850
    %852 = vadd.xlane.f32.xlu0 %v849
    %v853 = vpop.xlane.xlu0 %852
    %v854 = vmul.f32 %v851, %v66
    %v855 = vmul.f32 %v853, %v66
    %v856 = vadd.f32 %v854, 1e-05
    %v857 = vadd.f32 %v855, 1e-05
    %v858 = vrsqrt.pop %v856
    %v859 = vmul.f32 %v858, %v856
    %v860 = vmul.f32 %v859, %v858
    %v861 = vmul.f32 0.5, %v860
    %v862 = vsub.f32 1.5, %v861
    %v863 = vmul.f32 %v858, %v862
    %vm864 = vweird.f32 %v856
    %vm865 = vweird.f32 %v858
    %vm866 = vmor %vm864, %vm865
    %v867 = vsel %vm866, %v858, %v863
    %v868 = vrsqrt.pop %v857
    %v869 = vmul.f32 %v868, %v857
    %v870 = vmul.f32 %v869, %v868
    %v871 = vmul.f32 0.5, %v870
    %v872 = vsub.f32 1.5, %v871
    %v873 = vmul.f32 %v868, %v872
    %vm874 = vweird.f32 %v857
    %vm875 = vweird.f32 %v868
    %vm876 = vmor %vm874, %vm875
    %v877 = vsel %vm876, %v868, %v873
    %v878 = vmul.f32 %v846, %v867
    %v879 = vmul.f32 %v847, %v877
    %v880 = vperm.slane %v52, 4
    %v881 = vmul.f32 %v878, %v880
    %v882 = vmul.f32 %v879, %v880
    %v883 = vperm.slane %v52, 5
    %v884 = vadd.f32 %v881, %v883
    %v885 = vadd.f32 %v882, %v883
    %v886 = vlaneseq
    %v887 = vshrl.u32 %v886, 7
    %v888 = vlaneseq
    %v889 = vand.u32 %v888, 127
    %vm890 = vcmp.eq.s32.totalorder %v887, 0
    %s891 = sld [smem:[#allocation3]]
    %v892 = vstv %s891
    %v893 = vsel %vm890, %v892, 0
    %vm894 = vcmp.eq.s32.totalorder %v887, 1
    %s895 = sld [smem:[#allocation3 + $0x1]]
    %v896 = vstv %s895
    %v897 = vsel %vm894, %v896, %v893
    %vm898 = vcmp.eq.s32.totalorder %v889, %v897
    %v899 = vsel %vm898, 1.0, 0.0
    %v900 = vpack.c.bf16 %v899, %v899
    %v901 = vpack.c.bf16 %v885, %v884
    %v903 = vsel %vm343, %v900, 0
    %905 = vmatpush.bf16.msra.mxu0 0
    %906 = vmatpush.bf16.msra.mxu0 0
    %907 = vmatpush.bf16.msra.mxu0 0
    %908 = vmatpush.bf16.msra.mxu0 0
    %909 = vmatpush.bf16.msra.mxu0 0
    %910 = vmatpush.bf16.msra.mxu0 0
    %911 = vmatpush.bf16.msra.mxu0 0
    %912 = vmatpush.bf16.msra.mxu0 %v901
    %913 = vmatmul.bf16.gmra.mxu0 %v903
    %v914 = vpop.f32.mrf.mxu0
    %v915 = vadd.f32 0.0, %v914
    %v916 = vpop.f32.mrf.mxu0
    %917 = vdwg.mxu0
    %v918 = vpack.c.bf16 %v915, %v915
    %v919 = vld [vmem:[%s9] sm:$0xf]
    %v920 = vld [vmem:[%s9 + $0x4] sm:$0xf]
    %v921 = vld [vmem:[%s9 + $0x8] sm:$0xf]
    %v922 = vld [vmem:[%s9 + $0xc] sm:$0xf]
    %v923 = vld [vmem:[%s9 + $0x10] sm:$0xf]
    %v924 = vld [vmem:[%s9 + $0x14] sm:$0xf]
    %v925 = vld [vmem:[%s9 + $0x18] sm:$0xf]
    %v926 = vld [vmem:[%s9 + $0x1c] sm:$0xf]
    %v927 = vld [vmem:[%s9 + $0x20] sm:$0xf]
    %v928 = vld [vmem:[%s9 + $0x24] sm:$0xf]
    %v929 = vld [vmem:[%s9 + $0x28] sm:$0xf]
    %v930 = vld [vmem:[%s9 + $0x2c] sm:$0xf]
    %v931 = vld [vmem:[%s9 + $0x30] sm:$0xf]
    %v932 = vld [vmem:[%s9 + $0x34] sm:$0xf]
    %v933 = vld [vmem:[%s9 + $0x38] sm:$0xf]
    %v934 = vld [vmem:[%s9 + $0x3c] sm:$0xf]
    %v935 = vperm.slane %v53, 2
    %v952 = vunpack.c.l.b16 %v919
    %v953 = vunpack.c.l.b16 %v920
    %v954 = vunpack.c.l.b16 %v921
    %v955 = vunpack.c.l.b16 %v922
    %v956 = vunpack.c.l.b16 %v923
    %v957 = vunpack.c.l.b16 %v924
    %v958 = vunpack.c.l.b16 %v925
    %v959 = vunpack.c.l.b16 %v926
    %v960 = vunpack.c.l.b16 %v927
    %v961 = vunpack.c.l.b16 %v928
    %v962 = vunpack.c.l.b16 %v929
    %v963 = vunpack.c.l.b16 %v930
    %v964 = vunpack.c.l.b16 %v931
    %v965 = vunpack.c.l.b16 %v932
    %v966 = vunpack.c.l.b16 %v933
    %v967 = vunpack.c.l.b16 %v934
    %v968 = vpack.c.b16 %v953, %v952
    %v969 = vpack.c.b16 %v955, %v954
    %v970 = vpack.c.b16 %v957, %v956
    %v971 = vpack.c.b16 %v959, %v958
    %v972 = vpack.c.b16 %v961, %v960
    %v973 = vpack.c.b16 %v963, %v962
    %v974 = vpack.c.b16 %v965, %v964
    %v975 = vpack.c.b16 %v967, %v966
    %984 = vmatpush.bf16.msra.mxu0 %v975
    %985 = vmatpush.bf16.msra.mxu0 %v974
    %986 = vmatpush.bf16.msra.mxu0 %v973
    %987 = vmatpush.bf16.msra.mxu0 %v972
    %988 = vmatpush.bf16.msra.mxu0 %v971
    %989 = vmatpush.bf16.msra.mxu0 %v970
    %990 = vmatpush.bf16.msra.mxu0 %v969
    %991 = vmatpush.bf16.msra.mxu0 %v968
    %992 = vmatmul.bf16.gmra.mxu0 %v918
    %v993 = vpop.f32.mrf.mxu0
    %v994 = vadd.f32 %v935, %v993
    %v995 = vpop.f32.mrf.mxu0
    %996 = vdwg.mxu0
    %v997 = vmul.f32 %v994, %v994
    %v998 = vmul.f32 %v994, %v997
    %v999 = vmul.f32 %v998, 0.044715
    %v1000 = vadd.f32 %v994, %v999
    %v1001 = vmul.f32 %v1000, 0.7978846
    %v1002 = vtanh.pop %v1001
    %v1003 = vadd.f32 %v1002, 1.0
    %v1004 = vmul.f32 %v1003, 0.5
    %v1005 = vmul.f32 %v994, %v1004
    %vm1006 = vcmask 1041408
    %v1007 = vsel %vm1006, %v1005, 0.0
    %1008 = vadd.xlane.f32.xlu0 %v1007
    %v1009 = vpop.xlane.xlu0 %1008
    %v1010 = vmul.f32 %v1009, %v66
    %v1011 = vsub.f32 %v1005, %v1010
    %v1012 = vmul.f32 %v1011, %v1011
    %v1013 = vsel %vm1006, %v1012, 0.0
    %1014 = vadd.xlane.f32.xlu0 %v1013
    %v1015 = vpop.xlane.xlu0 %1014
    %v1016 = vmul.f32 %v1015, %v66
    %v1017 = vadd.f32 %v1016, 1e-05
    %v1018 = vrsqrt.pop %v1017
    %v1019 = vmul.f32 %v1018, %v1017
    %v1020 = vmul.f32 %v1019, %v1018
    %v1021 = vmul.f32 0.5, %v1020
    %v1022 = vsub.f32 1.5, %v1021
    %v1023 = vmul.f32 %v1018, %v1022
    %vm1024 = vweird.f32 %v1017
    %vm1025 = vweird.f32 %v1018
    %vm1026 = vmor %vm1024, %vm1025
    %v1027 = vsel %vm1026, %v1018, %v1023
    %v1028 = vmul.f32 %v1011, %v1027
    %v1029 = vperm.slane %v52, 6
    %v1030 = vmul.f32 %v1028, %v1029
    %v1031 = vperm.slane %v52, 7
    %v1032 = vadd.f32 %v1030, %v1031
    %v1033 = vpack.c.bf16 %v1032, %v1032
    %v1034 = vld [vmem:[%s11] sm:$0xf]
    %v1035 = vld [vmem:[%s12] sm:$0x1]
    %v1037 = vperm.slane %v1035, 0
    %1039 = vmatpush.bf16.xpose.msra.mxu0 0
    %1040 = vmatpush.bf16.xpose.msra.mxu0 0
    %1041 = vmatpush.bf16.xpose.msra.mxu0 0
    %1042 = vmatpush.bf16.xpose.msra.mxu0 0
    %1043 = vmatpush.bf16.xpose.msra.mxu0 0
    %1044 = vmatpush.bf16.xpose.msra.mxu0 0
    %1045 = vmatpush.bf16.xpose.msra.mxu0 0
    %1046 = vmatpush.bf16.xpose.msra.mxu0 %v1034
    %1047 = vmatmul.bf16.gmra.mxu0 %v1033
    %v1048 = vpop.f32.mrf.mxu0
    %v1049 = vadd.f32 %v1037, %v1048
    %v1050 = vpop.f32.mrf.mxu0
    %1051 = vdwg.mxu0
    %1053 = vrot.lane.b32.xlu0 %v1049, 124
    %v1054 = vpop.permute.xlu0 %1053
    %vm1056 = vcmask 1040384
    %v1057 = vsel %vm1056, %v1049, %v1054
    %vm1058 = vcmask 25600
    %1059 = vst.msk [vmem:[#allocation4] sm:$0x3] %vm1058, %v1057
    // Predicated region
    $region50: #{mcq_filler_forward.1} parent=1 // pred_check
      _
    $region51: #{mcq_filler_forward.1} parent=1 // pred_check_branch
      %1061 = sbr.rel (0) target = $region53
    $region52: #{mcq_filler_forward.1} parent=1 // pred_region
      %1063 = vsyncadd [#allocation5], 0
      %s1065 = sshll.u32 [#allocation4], 4
      %s1066 = int_to_ptr.vmem [resolvable:$true] %s1065
      %s1067 = sshll.u32 %s13, 4
      %s1068 = int_to_ptr.hbm [resolvable:$true] %s1067
      %1070 = dma.vmem_to_hbm [thread:$0]  %s1066, 32, %s1068, [#allocation5]
    $region53: #{mcq_filler_forward.1} parent=1 // pred_fallthru
      _
    // Predicated region
    $region54: #{mcq_filler_forward.1} parent=1 // pred_check
      _
    $region55: #{mcq_filler_forward.1} parent=1 // pred_check_branch
      %1072 = sbr.rel (0) target = $region57
    $region56: #{mcq_filler_forward.1} parent=1 // pred_region
      %1074 = dma.done [#allocation5], 32
    $region57: #{mcq_filler_forward.1} parent=1 // pred_fallthru
      _
    %1075 = vsyncpa [#allocation5], 1

</llo_original>
